<compile_context>
chip_gen: v7x
topology: tpu7x:2x2x1
jax: 0.10.0
libtpu: 0.0.40
codegen_flags: <defaults>
</compile_context>

<pallas_src>
import functools

import jax
import jax.numpy as jnp
import numpy as np
from jax import lax
from jax.experimental import pallas as pl
from jax.experimental.pallas import tpu as pltpu

H = 32          # hidden size fixed by the module (pi1/pi2/v1/v2/LSTM hidden)
HEAD_W = 128    # lane-dense fused head output width (>= a_dim + 1)


def _slab_rows(s_pad):
    """Row offsets of each fused weight inside the single (rows, 256) slab.

    All offsets are multiples of 8 (sublane-aligned static slices)."""
    rows, off = {}, 0
    for name, n in (("whh", 2 * H), ("wih", 2 * H), ("bgate", 8),
                    ("w1", s_pad), ("b1", 8), ("w2", 2 * H), ("b2", 8),
                    ("whead", 2 * H), ("bhead", 8)):
        rows[name] = off
        off += n
    rows["total"] = off
    return rows


# ----------------------------------------------------------------------------
# Kernel (one grid step == one independent (T, B) sequence)
# ----------------------------------------------------------------------------
def a3c_fused_kernel(x_ref, w_ref, out_ref, gih_ref, *, T, B, S):
    """x_ref: (T*B, S) sequence block. w_ref: (rows, 256) resident weight slab.
    out_ref: (B, 128) fused [logits | values | 0]. gih_ref: (T*B, 256) scratch."""
    r = _slab_rows(S)

    # --- carve the resident weight slab (static, sublane-aligned slices) ----
    whh = w_ref[r["whh"]:r["whh"] + 2 * H, :].astype(jnp.bfloat16)        # (64,256)
    wih = w_ref[r["wih"]:r["wih"] + 2 * H, :].astype(jnp.bfloat16)        # (64,256)
    bgate = w_ref[r["bgate"]:r["bgate"] + 1, :]                           # (1,256) f32
    w1 = w_ref[r["w1"]:r["w1"] + S, :][:, :2 * H].astype(jnp.bfloat16)    # (S,64)
    b1 = w_ref[r["b1"]:r["b1"] + 1, :][:, :2 * H]                         # (1,64)  f32
    w2 = w_ref[r["w2"]:r["w2"] + 2 * H, :][:, :2 * H].astype(jnp.bfloat16)
    b2 = w_ref[r["b2"]:r["b2"] + 1, :][:, :2 * H]
    whead = w_ref[r["whead"]:r["whead"] + 2 * H, :][:, :HEAD_W].astype(jnp.bfloat16)
    bhead = w_ref[r["bhead"]:r["bhead"] + 1, :][:, :HEAD_W]

    # --- hoisted, batched feed-forward path (all T steps at once) -----------
    x = x_ref[...].astype(jnp.bfloat16)                                   # (T*B, S)
    # h1 = [relu(x@Wpi1+bpi1) | relu(x@Wv1+bv1)]          -> (T*B, 64)
    h1 = jnp.maximum(jnp.dot(x, w1, preferred_element_type=jnp.float32) + b1, 0.0)
    # h2 = [relu(pi1@Wpi2+bpi2) | relu(v1@Wv2+bv2)]       -> (T*B, 64)
    h2 = jnp.maximum(jnp.dot(h1.astype(jnp.bfloat16), w2,
                             preferred_element_type=jnp.float32) + b2, 0.0)
    # LSTM input-gate projections + biases, both cells, gate-major layout
    # [i_p,i_c | f_p,f_c | g_p,g_c | o_p,o_c]; g lanes pre-scaled by 2.
    gih_ref[...] = (jnp.dot(h2.astype(jnp.bfloat16), wih,
                            preferred_element_type=jnp.float32) + bgate)  # (T*B,256)

    # lane mask selecting the g-gate quarter (lanes 4H:6H)
    lane = lax.broadcasted_iota(jnp.int32, (B, 8 * H), 1)
    g_mask = (lane >= 4 * H) & (lane < 6 * H)

    # --- serial recurrence: one fused (B,64)x(64,256) gate matmul per step --
    # TODO(synk): switch the Python loop to lax.fori_loop(unroll=2) if T grows
    #             beyond ~8 (no change needed at T=8).
    h = jnp.zeros((B, 2 * H), jnp.float32)    # [h_policy | h_critic]
    c = jnp.zeros((B, 2 * H), jnp.float32)    # [c_policy | c_critic]
    for t in range(T):
        g_in = gih_ref[t * B:(t + 1) * B, :]                              # (B, 256)
        if t == 0:
            gates = g_in                       # h == 0 at t=0, skip the matmul
        else:
            gates = g_in + jnp.dot(h.astype(jnp.bfloat16), whh,
                                   preferred_element_type=jnp.float32)
        # single EUP pass: sigmoid on all 256 lanes; tanh(z) = 2*sigmoid(2z)-1
        # (g-gate pre-activations were scaled by 2 at fuse time, exactly).
        sg = jax.nn.sigmoid(gates)
        act = jnp.where(g_mask, 2.0 * sg - 1.0, sg)
        i_g = act[:, 0 * H:2 * H]              # (B, 64)  [policy | critic]
        f_g = act[:, 2 * H:4 * H]
        g_g = act[:, 4 * H:6 * H]
        o_g = act[:, 6 * H:8 * H]
        c = f_g * c + i_g * g_g
        h = o_g * jnp.tanh(c)

    # fused heads: [logits | values | 0...] in one lane-dense (B, 128) store
    out_ref[...] = (jnp.dot(h.astype(jnp.bfloat16), whead,
                            preferred_element_type=jnp.float32) + bhead)


# ----------------------------------------------------------------------------
# Parameter init (original layout) and fusion into the kernel slab layout
# ----------------------------------------------------------------------------
def init_params(key, s_dim, a_dim):
    ks = jax.random.split(key, 18)
    n = lambda k, shape, scale=0.1: (scale * jax.random.normal(k, shape)).astype(jnp.float32)
    return {
        # policy MLP
        "wpi1": n(ks[0], (s_dim, H)), "bpi1": n(ks[1], (1, H)),
        "wpi2": n(ks[2], (H, H)),     "bpi2": n(ks[3], (1, H)),
        # policy LSTM (W_ih^T, W_hh^T, combined bias b_ih + b_hh), gate order i,f,g,o
        "wihp": n(ks[4], (H, 4 * H)), "whhp": n(ks[5], (H, 4 * H)), "bp": n(ks[6], (1, 4 * H)),
        "wpo": n(ks[7], (H, a_dim)),  "bpo": n(ks[8], (1, a_dim)),
        # critic MLP
        "wv1": n(ks[9], (s_dim, H)),  "bv1": n(ks[10], (1, H)),
        "wv2": n(ks[11], (H, H)),     "bv2": n(ks[12], (1, H)),
        # critic LSTM
        "wihc": n(ks[13], (H, 4 * H)), "whhc": n(ks[14], (H, 4 * H)), "bc": n(ks[15], (1, 4 * H)),
        "wvo": n(ks[16], (H, 1)),      "bvo": n(ks[17], (1, 1)),
    }


def _fuse_gate_mats(wp, wc):
    """(in,4H) policy + (in,4H) critic -> (2*in, 8H) block-diag, gate-major
    layout [i_p,i_c | f_p,f_c | g_p,g_c | o_p,o_c]."""
    in_p = wp.shape[0]
    out = jnp.zeros((in_p + wc.shape[0], 8 * H), jnp.float32)
    for k in range(4):  # i, f, g, o
        out = out.at[:in_p, 2 * k * H:2 * k * H + H].set(wp[:, k * H:(k + 1) * H])
        out = out.at[in_p:, 2 * k * H + H:2 * (k + 1) * H].set(wc[:, k * H:(k + 1) * H])
    return out


def _fuse_gate_bias(bp, bc):
    out = jnp.zeros((1, 8 * H), jnp.float32)
    for k in range(4):
        out = out.at[:, 2 * k * H:2 * k * H + H].set(bp[:, k * H:(k + 1) * H])
        out = out.at[:, 2 * k * H + H:2 * (k + 1) * H].set(bc[:, k * H:(k + 1) * H])
    return out


def prepare_fused_params(p):
    """One-time weight repack into a single (rows, 256) VMEM-resident slab."""
    a_dim = int(p["wpo"].shape[1])
    s_dim = int(p["wpi1"].shape[0])
    assert a_dim + 1 <= HEAD_W
    s_pad = max(8, -(-s_dim // 8) * 8)
    rows = _slab_rows(s_pad)

    # layer 1 (shared input x): concat outputs                  -> (s_dim, 64)
    w1 = jnp.concatenate([p["wpi1"], p["wv1"]], axis=1)
    b1 = jnp.concatenate([p["bpi1"], p["bv1"]], axis=1)
    # layer 2: block diagonal                                   -> (64, 64)
    w2 = jnp.zeros((2 * H, 2 * H), jnp.float32)
    w2 = w2.at[:H, :H].set(p["wpi2"]).at[H:, H:].set(p["wv2"])
    b2 = jnp.concatenate([p["bpi2"], p["bv2"]], axis=1)
    # LSTM input / recurrent projections, fused gate-major      -> (64, 256)
    wih = _fuse_gate_mats(p["wihp"], p["wihc"])
    whh = _fuse_gate_mats(p["whhp"], p["whhc"])
    bgate = _fuse_gate_bias(p["bp"], p["bc"])                   # (1, 256)
    # single-sigmoid trick: tanh(z) = 2*sigmoid(2z)-1 -> pre-scale g lanes by 2
    lane = jnp.arange(8 * H)
    gscale = jnp.where((lane >= 4 * H) & (lane < 6 * H), 2.0, 1.0).astype(jnp.float32)
    wih = wih * gscale[None, :]
    whh = whh * gscale[None, :]
    bgate = bgate * gscale[None, :]
    # fused lane-dense head: [logits | values | zeros]          -> (64, 128)
    whead = jnp.zeros((2 * H, HEAD_W), jnp.float32)
    whead = whead.at[:H, :a_dim].set(p["wpo"])
    whead = whead.at[H:, a_dim:a_dim + 1].set(p["wvo"])
    bhead = jnp.zeros((1, HEAD_W), jnp.float32)
    bhead = bhead.at[:, :a_dim].set(p["bpo"])
    bhead = bhead.at[:, a_dim:a_dim + 1].set(p["bvo"])

    # pack everything into one 256-lane slab (single weight DMA, VMEM-resident)
    slab = jnp.zeros((rows["total"], 8 * H), jnp.float32)
    slab = slab.at[rows["whh"]:rows["whh"] + 2 * H, :].set(whh)
    slab = slab.at[rows["wih"]:rows["wih"] + 2 * H, :].set(wih)
    slab = slab.at[rows["bgate"], :].set(bgate[0])
    slab = slab.at[rows["w1"]:rows["w1"] + s_dim, :2 * H].set(w1)
    slab = slab.at[rows["b1"], :2 * H].set(b1[0])
    slab = slab.at[rows["w2"]:rows["w2"] + 2 * H, :2 * H].set(w2)
    slab = slab.at[rows["b2"], :2 * H].set(b2[0])
    slab = slab.at[rows["whead"]:rows["whead"] + 2 * H, :HEAD_W].set(whead)
    slab = slab.at[rows["bhead"], :HEAD_W].set(bhead[0])
    return {"slab": slab, "a_dim": a_dim, "s_dim": s_dim, "s_pad": s_pad}


# ----------------------------------------------------------------------------
# Wrapper
# ----------------------------------------------------------------------------
def a3c_forward(x, fused):
    """x: (N, T, B, s_dim) independent sequences -> (N, B, a_dim), (N, B, 1)."""
    N, T, B, S = x.shape
    a_dim, s_pad = fused["a_dim"], fused["s_pad"]
    # pad batch to a full sublane group (8) and features to a multiple of 8
    B_pad = max(8, -(-B // 8) * 8)
    x_pad = jnp.pad(x.astype(jnp.float32),
                    ((0, 0), (0, 0), (0, B_pad - B), (0, s_pad - S)))
    x2d = x_pad.reshape(N * T * B_pad, s_pad)
    slab = fused["slab"]

    out = pl.pallas_call(
        functools.partial(a3c_fused_kernel, T=T, B=B_pad, S=s_pad),
        out_shape=jax.ShapeDtypeStruct((N * B_pad, HEAD_W), jnp.float32),
        grid_spec=pltpu.PrefetchScalarGridSpec(
            num_scalar_prefetch=0,
            grid=(N,),                                            # one step / sequence
            in_specs=[
                pl.BlockSpec((T * B_pad, s_pad), lambda s: (s, 0)),   # pipelined x
                pl.BlockSpec(slab.shape, lambda s: (0, 0)),           # resident weights
            ],
            out_specs=pl.BlockSpec((B_pad, HEAD_W), lambda s: (s, 0)),
            scratch_shapes=[pltpu.VMEM((T * B_pad, 8 * H), jnp.float32)],  # gih
        ),
        compiler_params=pltpu.CompilerParams(
            dimension_semantics=("parallel",)),    # shard sequences across v7x TCs
    )(x2d, slab)

    out = out.reshape(N, B_pad, HEAD_W)
    logits = out[:, :B, :a_dim]
    values = out[:, :B, a_dim:a_dim + 1]
    return logits, values


# ----------------------------------------------------------------------------
# Pure-JAX reference (PyTorch semantics), per sequence
# ----------------------------------------------------------------------------
def a3c_forward_ref(x, p):
    T, B, S = x.shape
    pi1 = jax.nn.relu(x @ p["wpi1"] + p["bpi1"])
    pi2 = jax.nn.relu(pi1 @ p["wpi2"] + p["bpi2"])
    v1 = jax.nn.relu(x @ p["wv1"] + p["bv1"])
    v2 = jax.nn.relu(v1 @ p["wv2"] + p["bv2"])

    def run_lstm(seq, wih, whh, b):
        def step(carry, xt):
            h, c = carry
            gates = xt @ wih + h @ whh + b
            i = jax.nn.sigmoid(gates[:, 0 * H:1 * H])
            f = jax.nn.sigmoid(gates[:, 1 * H:2 * H])
            g = jnp.tanh(gates[:, 2 * H:3 * H])
            o = jax.nn.sigmoid(gates[:, 3 * H:4 * H])
            c = f * c + i * g
            h = o * jnp.tanh(c)
            return (h, c), h
        (h, _), _ = lax.scan(step, (jnp.zeros((B, H)), jnp.zeros((B, H))), seq)
        return h

    hp = run_lstm(pi2, p["wihp"], p["whhp"], p["bp"])
    hc = run_lstm(v2, p["wihc"], p["whhc"], p["bc"])
    logits = hp @ p["wpo"] + p["bpo"]
    values = hc @ p["wvo"] + p["bvo"]
    return logits, values


if __name__ == "__main__":
    N, T, B, S_DIM, A_DIM = 8, 8, 2, 16, 4
    key = jax.random.PRNGKey(0)
    kx, kp = jax.random.split(key)
    x = jax.random.normal(kx, (N, T, B, S_DIM), dtype=jnp.float32)
    params = init_params(kp, S_DIM, A_DIM)
    fused = prepare_fused_params(params)

    logits, values = jax.block_until_ready(a3c_forward(x, fused))
    logits_ref, values_ref = jax.vmap(lambda xs: a3c_forward_ref(xs, params))(x)

    # bf16 matmul operands (per perf review) perturb the 8-step recurrence at
    # roughly the 1e-3 level; validate at a 1e-2 tolerance.
    np.testing.assert_allclose(np.asarray(logits), np.asarray(logits_ref),
                               rtol=1e-2, atol=1e-2)
    np.testing.assert_allclose(np.asarray(values), np.asarray(values_ref),
                               rtol=1e-2, atol=1e-2)
    assert logits.shape == (N, B, A_DIM) and values.shape == (N, B, 1)
    print("KERNEL_OK")
</pallas_src>

<mosaic_0001>
module attributes {stable_mosaic.version = 11 : i64} {
  func.func @a3c_fused_kernel(%arg0: i32, %arg1: memref<64x16xf32, #tpu.memory_space<vmem>>, %arg2: memref<304x256xf32, #tpu.memory_space<vmem>>, %arg3: memref<8x128xf32, #tpu.memory_space<vmem>>, %arg4: memref<64x256xf32, #tpu.memory_space<vmem>>) attributes {dimension_semantics = [#tpu.dimension_semantics<parallel>], iteration_bounds = array<i64: 8>, scalar_prefetch = 0 : i64, scratch_operands = 1 : i64, tpu.core_type = #tpu.core_type<tc>, window_params = [{transform_indices = @transform_0, window_bounds = array<i64: 64, 16>}, {pipeline_mode = #tpu.pipeline_mode<synchronous>, transform_indices = @transform_1, window_bounds = array<i64: 304, 256>}, {transform_indices = @transform_2, window_bounds = array<i64: 8, 128>}]} {
    %c0 = arith.constant 0 : index
    %c0_0 = arith.constant 0 : index
    %0 = vector.load %arg2[%c0, %c0_0] : memref<304x256xf32, #tpu.memory_space<vmem>>, vector<64x256xf32>
    %1 = arith.truncf %0 : vector<64x256xf32> to vector<64x256xbf16>
    %c64 = arith.constant 64 : index
    %c0_1 = arith.constant 0 : index
    %2 = vector.load %arg2[%c64, %c0_1] : memref<304x256xf32, #tpu.memory_space<vmem>>, vector<64x256xf32>
    %3 = arith.truncf %2 : vector<64x256xf32> to vector<64x256xbf16>
    %c128 = arith.constant 128 : index
    %c0_2 = arith.constant 0 : index
    %4 = vector.load %arg2[%c128, %c0_2] : memref<304x256xf32, #tpu.memory_space<vmem>>, vector<1x256xf32>
    %c136 = arith.constant 136 : index
    %c0_3 = arith.constant 0 : index
    %5 = vector.load %arg2[%c136, %c0_3] : memref<304x256xf32, #tpu.memory_space<vmem>>, vector<16x256xf32>
    %6 = vector.extract_strided_slice %5 {offsets = [0, 0], sizes = [16, 64], strides = [1, 1]} : vector<16x256xf32> to vector<16x64xf32>
    %7 = arith.truncf %6 : vector<16x64xf32> to vector<16x64xbf16>
    %c152 = arith.constant 152 : index
    %c0_4 = arith.constant 0 : index
    %8 = vector.load %arg2[%c152, %c0_4] : memref<304x256xf32, #tpu.memory_space<vmem>>, vector<1x256xf32>
    %9 = vector.extract_strided_slice %8 {offsets = [0, 0], sizes = [1, 64], strides = [1, 1]} : vector<1x256xf32> to vector<1x64xf32>
    %c160 = arith.constant 160 : index
    %c0_5 = arith.constant 0 : index
    %10 = vector.load %arg2[%c160, %c0_5] : memref<304x256xf32, #tpu.memory_space<vmem>>, vector<64x256xf32>
    %11 = vector.extract_strided_slice %10 {offsets = [0, 0], sizes = [64, 64], strides = [1, 1]} : vector<64x256xf32> to vector<64x64xf32>
    %12 = arith.truncf %11 : vector<64x64xf32> to vector<64x64xbf16>
    %c224 = arith.constant 224 : index
    %c0_6 = arith.constant 0 : index
    %13 = vector.load %arg2[%c224, %c0_6] : memref<304x256xf32, #tpu.memory_space<vmem>>, vector<1x256xf32>
    %14 = vector.extract_strided_slice %13 {offsets = [0, 0], sizes = [1, 64], strides = [1, 1]} : vector<1x256xf32> to vector<1x64xf32>
    %c232 = arith.constant 232 : index
    %c0_7 = arith.constant 0 : index
    %15 = vector.load %arg2[%c232, %c0_7] : memref<304x256xf32, #tpu.memory_space<vmem>>, vector<64x256xf32>
    %16 = vector.extract_strided_slice %15 {offsets = [0, 0], sizes = [64, 128], strides = [1, 1]} : vector<64x256xf32> to vector<64x128xf32>
    %17 = arith.truncf %16 : vector<64x128xf32> to vector<64x128xbf16>
    %c296 = arith.constant 296 : index
    %c0_8 = arith.constant 0 : index
    %18 = vector.load %arg2[%c296, %c0_8] : memref<304x256xf32, #tpu.memory_space<vmem>>, vector<1x256xf32>
    %19 = vector.extract_strided_slice %18 {offsets = [0, 0], sizes = [1, 128], strides = [1, 1]} : vector<1x256xf32> to vector<1x128xf32>
    %c0_9 = arith.constant 0 : index
    %c0_10 = arith.constant 0 : index
    %20 = vector.load %arg1[%c0_9, %c0_10] : memref<64x16xf32, #tpu.memory_space<vmem>>, vector<64x16xf32>
    %21 = arith.truncf %20 : vector<64x16xf32> to vector<64x16xbf16>
    %cst = arith.constant dense<0.000000e+00> : vector<64x64xf32>
    %22 = tpu.matmul %21, %7, %cst {dimension_numbers = #tpu.dot_dimension_numbers<[1], [0], [0], [1], [0, 0, 1, 1], [], []>} : vector<64x16xbf16>, vector<16x64xbf16>, vector<64x64xf32> -> vector<64x64xf32>
    %23 = vector.broadcast %9 : vector<1x64xf32> to vector<64x64xf32>
    %24 = arith.addf %22, %23 : vector<64x64xf32>
    %cst_11 = arith.constant 0.000000e+00 : f32
    %25 = vector.broadcast %cst_11 : f32 to vector<64x64xf32>
    %26 = arith.maximumf %24, %25 : vector<64x64xf32>
    %27 = arith.truncf %26 : vector<64x64xf32> to vector<64x64xbf16>
    %cst_12 = arith.constant dense<0.000000e+00> : vector<64x64xf32>
    %28 = tpu.matmul %27, %12, %cst_12 {dimension_numbers = #tpu.dot_dimension_numbers<[1], [0], [0], [1], [0, 0, 1, 1], [], []>} : vector<64x64xbf16>, vector<64x64xbf16>, vector<64x64xf32> -> vector<64x64xf32>
    %29 = vector.broadcast %14 : vector<1x64xf32> to vector<64x64xf32>
    %30 = arith.addf %28, %29 : vector<64x64xf32>
    %cst_13 = arith.constant 0.000000e+00 : f32
    %31 = vector.broadcast %cst_13 : f32 to vector<64x64xf32>
    %32 = arith.maximumf %30, %31 : vector<64x64xf32>
    %33 = arith.truncf %32 : vector<64x64xf32> to vector<64x64xbf16>
    %cst_14 = arith.constant dense<0.000000e+00> : vector<64x256xf32>
    %34 = tpu.matmul %33, %3, %cst_14 {dimension_numbers = #tpu.dot_dimension_numbers<[1], [0], [0], [1], [0, 0, 1, 1], [], []>} : vector<64x64xbf16>, vector<64x256xbf16>, vector<64x256xf32> -> vector<64x256xf32>
    %35 = vector.broadcast %4 : vector<1x256xf32> to vector<64x256xf32>
    %36 = arith.addf %34, %35 : vector<64x256xf32>
    %c0_15 = arith.constant 0 : index
    %c0_16 = arith.constant 0 : index
    %37 = vector.load %arg4[%c0_15, %c0_16] : memref<64x256xf32, #tpu.memory_space<vmem>>, vector<64x256xf32>
    tpu.vector_store %arg4[%c0_15, %c0_16], %36 {strides = array<i32>} : memref<64x256xf32, #tpu.memory_space<vmem>>, vector<64x256xf32>,
    %38 = tpu.iota {dimensions = array<i32: 1>} : vector<8x256xi32>
    %c128_i32 = arith.constant 128 : i32
    %39 = vector.broadcast %c128_i32 : i32 to vector<8x256xi32>
    %40 = arith.cmpi sge, %38, %39 : vector<8x256xi32>
    %c192_i32 = arith.constant 192 : i32
    %41 = vector.broadcast %c192_i32 : i32 to vector<8x256xi32>
    %42 = arith.cmpi slt, %38, %41 : vector<8x256xi32>
    %43 = arith.andi %40, %42 : vector<8x256xi1>
    %cst_17 = arith.constant 0.000000e+00 : f32
    %44 = vector.broadcast %cst_17 : f32 to vector<8x64xf32>
    %c0_18 = arith.constant 0 : index
    %c0_19 = arith.constant 0 : index
    %45 = vector.load %arg4[%c0_18, %c0_19] : memref<64x256xf32, #tpu.memory_space<vmem>>, vector<8x256xf32>
    %46 = arith.negf %45 : vector<8x256xf32>
    %47 = math.exp %46 : vector<8x256xf32>
    %cst_20 = arith.constant 1.000000e+00 : f32
    %48 = vector.broadcast %cst_20 : f32 to vector<8x256xf32>
    %49 = arith.addf %48, %47 : vector<8x256xf32>
    %50 = arith.divf %48, %49 : vector<8x256xf32>
    %cst_21 = arith.constant 2.000000e+00 : f32
    %51 = vector.broadcast %cst_21 : f32 to vector<8x256xf32>
    %52 = arith.mulf %51, %50 : vector<8x256xf32>
    %cst_22 = arith.constant 1.000000e+00 : f32
    %53 = vector.broadcast %cst_22 : f32 to vector<8x256xf32>
    %54 = arith.subf %52, %53 : vector<8x256xf32>
    %55 = arith.select %43, %54, %50 : vector<8x256xi1>, vector<8x256xf32>
    %56 = vector.extract_strided_slice %55 {offsets = [0, 0], sizes = [8, 64], strides = [1, 1]} : vector<8x256xf32> to vector<8x64xf32>
    %57 = vector.extract_strided_slice %55 {offsets = [0, 64], sizes = [8, 64], strides = [1, 1]} : vector<8x256xf32> to vector<8x64xf32>
    %58 = vector.extract_strided_slice %55 {offsets = [0, 128], sizes = [8, 64], strides = [1, 1]} : vector<8x256xf32> to vector<8x64xf32>
    %59 = vector.extract_strided_slice %55 {offsets = [0, 192], sizes = [8, 64], strides = [1, 1]} : vector<8x256xf32> to vector<8x64xf32>
    %60 = arith.mulf %57, %44 : vector<8x64xf32>
    %61 = arith.mulf %56, %58 : vector<8x64xf32>
    %62 = arith.addf %60, %61 : vector<8x64xf32>
    %63 = math.tanh %62 : vector<8x64xf32>
    %64 = arith.mulf %59, %63 : vector<8x64xf32>
    %c8 = arith.constant 8 : index
    %c0_23 = arith.constant 0 : index
    %65 = vector.load %arg4[%c8, %c0_23] : memref<64x256xf32, #tpu.memory_space<vmem>>, vector<8x256xf32>
    %66 = arith.truncf %64 : vector<8x64xf32> to vector<8x64xbf16>
    %cst_24 = arith.constant dense<0.000000e+00> : vector<8x256xf32>
    %67 = tpu.matmul %66, %1, %cst_24 {dimension_numbers = #tpu.dot_dimension_numbers<[1], [0], [0], [1], [0, 0, 1, 1], [], []>} : vector<8x64xbf16>, vector<64x256xbf16>, vector<8x256xf32> -> vector<8x256xf32>
    %68 = arith.addf %65, %67 : vector<8x256xf32>
    %69 = arith.negf %68 : vector<8x256xf32>
    %70 = math.exp %69 : vector<8x256xf32>
    %cst_25 = arith.constant 1.000000e+00 : f32
    %71 = vector.broadcast %cst_25 : f32 to vector<8x256xf32>
    %72 = arith.addf %71, %70 : vector<8x256xf32>
    %73 = arith.divf %71, %72 : vector<8x256xf32>
    %cst_26 = arith.constant 2.000000e+00 : f32
    %74 = vector.broadcast %cst_26 : f32 to vector<8x256xf32>
    %75 = arith.mulf %74, %73 : vector<8x256xf32>
    %cst_27 = arith.constant 1.000000e+00 : f32
    %76 = vector.broadcast %cst_27 : f32 to vector<8x256xf32>
    %77 = arith.subf %75, %76 : vector<8x256xf32>
    %78 = arith.select %43, %77, %73 : vector<8x256xi1>, vector<8x256xf32>
    %79 = vector.extract_strided_slice %78 {offsets = [0, 0], sizes = [8, 64], strides = [1, 1]} : vector<8x256xf32> to vector<8x64xf32>
    %80 = vector.extract_strided_slice %78 {offsets = [0, 64], sizes = [8, 64], strides = [1, 1]} : vector<8x256xf32> to vector<8x64xf32>
    %81 = vector.extract_strided_slice %78 {offsets = [0, 128], sizes = [8, 64], strides = [1, 1]} : vector<8x256xf32> to vector<8x64xf32>
    %82 = vector.extract_strided_slice %78 {offsets = [0, 192], sizes = [8, 64], strides = [1, 1]} : vector<8x256xf32> to vector<8x64xf32>
    %83 = arith.mulf %80, %62 : vector<8x64xf32>
    %84 = arith.mulf %79, %81 : vector<8x64xf32>
    %85 = arith.addf %83, %84 : vector<8x64xf32>
    %86 = math.tanh %85 : vector<8x64xf32>
    %87 = arith.mulf %82, %86 : vector<8x64xf32>
    %c16 = arith.constant 16 : index
    %c0_28 = arith.constant 0 : index
    %88 = vector.load %arg4[%c16, %c0_28] : memref<64x256xf32, #tpu.memory_space<vmem>>, vector<8x256xf32>
    %89 = arith.truncf %87 : vector<8x64xf32> to vector<8x64xbf16>
    %cst_29 = arith.constant dense<0.000000e+00> : vector<8x256xf32>
    %90 = tpu.matmul %89, %1, %cst_29 {dimension_numbers = #tpu.dot_dimension_numbers<[1], [0], [0], [1], [0, 0, 1, 1], [], []>} : vector<8x64xbf16>, vector<64x256xbf16>, vector<8x256xf32> -> vector<8x256xf32>
    %91 = arith.addf %88, %90 : vector<8x256xf32>
    %92 = arith.negf %91 : vector<8x256xf32>
    %93 = math.exp %92 : vector<8x256xf32>
    %cst_30 = arith.constant 1.000000e+00 : f32
    %94 = vector.broadcast %cst_30 : f32 to vector<8x256xf32>
    %95 = arith.addf %94, %93 : vector<8x256xf32>
    %96 = arith.divf %94, %95 : vector<8x256xf32>
    %cst_31 = arith.constant 2.000000e+00 : f32
    %97 = vector.broadcast %cst_31 : f32 to vector<8x256xf32>
    %98 = arith.mulf %97, %96 : vector<8x256xf32>
    %cst_32 = arith.constant 1.000000e+00 : f32
    %99 = vector.broadcast %cst_32 : f32 to vector<8x256xf32>
    %100 = arith.subf %98, %99 : vector<8x256xf32>
    %101 = arith.select %43, %100, %96 : vector<8x256xi1>, vector<8x256xf32>
    %102 = vector.extract_strided_slice %101 {offsets = [0, 0], sizes = [8, 64], strides = [1, 1]} : vector<8x256xf32> to vector<8x64xf32>
    %103 = vector.extract_strided_slice %101 {offsets = [0, 64], sizes = [8, 64], strides = [1, 1]} : vector<8x256xf32> to vector<8x64xf32>
    %104 = vector.extract_strided_slice %101 {offsets = [0, 128], sizes = [8, 64], strides = [1, 1]} : vector<8x256xf32> to vector<8x64xf32>
    %105 = vector.extract_strided_slice %101 {offsets = [0, 192], sizes = [8, 64], strides = [1, 1]} : vector<8x256xf32> to vector<8x64xf32>
    %106 = arith.mulf %103, %85 : vector<8x64xf32>
    %107 = arith.mulf %102, %104 : vector<8x64xf32>
    %108 = arith.addf %106, %107 : vector<8x64xf32>
    %109 = math.tanh %108 : vector<8x64xf32>
    %110 = arith.mulf %105, %109 : vector<8x64xf32>
    %c24 = arith.constant 24 : index
    %c0_33 = arith.constant 0 : index
    %111 = vector.load %arg4[%c24, %c0_33] : memref<64x256xf32, #tpu.memory_space<vmem>>, vector<8x256xf32>
    %112 = arith.truncf %110 : vector<8x64xf32> to vector<8x64xbf16>
    %cst_34 = arith.constant dense<0.000000e+00> : vector<8x256xf32>
    %113 = tpu.matmul %112, %1, %cst_34 {dimension_numbers = #tpu.dot_dimension_numbers<[1], [0], [0], [1], [0, 0, 1, 1], [], []>} : vector<8x64xbf16>, vector<64x256xbf16>, vector<8x256xf32> -> vector<8x256xf32>
    %114 = arith.addf %111, %113 : vector<8x256xf32>
    %115 = arith.negf %114 : vector<8x256xf32>
    %116 = math.exp %115 : vector<8x256xf32>
    %cst_35 = arith.constant 1.000000e+00 : f32
    %117 = vector.broadcast %cst_35 : f32 to vector<8x256xf32>
    %118 = arith.addf %117, %116 : vector<8x256xf32>
    %119 = arith.divf %117, %118 : vector<8x256xf32>
    %cst_36 = arith.constant 2.000000e+00 : f32
    %120 = vector.broadcast %cst_36 : f32 to vector<8x256xf32>
    %121 = arith.mulf %120, %119 : vector<8x256xf32>
    %cst_37 = arith.constant 1.000000e+00 : f32
    %122 = vector.broadcast %cst_37 : f32 to vector<8x256xf32>
    %123 = arith.subf %121, %122 : vector<8x256xf32>
    %124 = arith.select %43, %123, %119 : vector<8x256xi1>, vector<8x256xf32>
    %125 = vector.extract_strided_slice %124 {offsets = [0, 0], sizes = [8, 64], strides = [1, 1]} : vector<8x256xf32> to vector<8x64xf32>
    %126 = vector.extract_strided_slice %124 {offsets = [0, 64], sizes = [8, 64], strides = [1, 1]} : vector<8x256xf32> to vector<8x64xf32>
    %127 = vector.extract_strided_slice %124 {offsets = [0, 128], sizes = [8, 64], strides = [1, 1]} : vector<8x256xf32> to vector<8x64xf32>
    %128 = vector.extract_strided_slice %124 {offsets = [0, 192], sizes = [8, 64], strides = [1, 1]} : vector<8x256xf32> to vector<8x64xf32>
    %129 = arith.mulf %126, %108 : vector<8x64xf32>
    %130 = arith.mulf %125, %127 : vector<8x64xf32>
    %131 = arith.addf %129, %130 : vector<8x64xf32>
    %132 = math.tanh %131 : vector<8x64xf32>
    %133 = arith.mulf %128, %132 : vector<8x64xf32>
    %c32 = arith.constant 32 : index
    %c0_38 = arith.constant 0 : index
    %134 = vector.load %arg4[%c32, %c0_38] : memref<64x256xf32, #tpu.memory_space<vmem>>, vector<8x256xf32>
    %135 = arith.truncf %133 : vector<8x64xf32> to vector<8x64xbf16>
    %cst_39 = arith.constant dense<0.000000e+00> : vector<8x256xf32>
    %136 = tpu.matmul %135, %1, %cst_39 {dimension_numbers = #tpu.dot_dimension_numbers<[1], [0], [0], [1], [0, 0, 1, 1], [], []>} : vector<8x64xbf16>, vector<64x256xbf16>, vector<8x256xf32> -> vector<8x256xf32>
    %137 = arith.addf %134, %136 : vector<8x256xf32>
    %138 = arith.negf %137 : vector<8x256xf32>
    %139 = math.exp %138 : vector<8x256xf32>
    %cst_40 = arith.constant 1.000000e+00 : f32
    %140 = vector.broadcast %cst_40 : f32 to vector<8x256xf32>
    %141 = arith.addf %140, %139 : vector<8x256xf32>
    %142 = arith.divf %140, %141 : vector<8x256xf32>
    %cst_41 = arith.constant 2.000000e+00 : f32
    %143 = vector.broadcast %cst_41 : f32 to vector<8x256xf32>
    %144 = arith.mulf %143, %142 : vector<8x256xf32>
    %cst_42 = arith.constant 1.000000e+00 : f32
    %145 = vector.broadcast %cst_42 : f32 to vector<8x256xf32>
    %146 = arith.subf %144, %145 : vector<8x256xf32>
    %147 = arith.select %43, %146, %142 : vector<8x256xi1>, vector<8x256xf32>
    %148 = vector.extract_strided_slice %147 {offsets = [0, 0], sizes = [8, 64], strides = [1, 1]} : vector<8x256xf32> to vector<8x64xf32>
    %149 = vector.extract_strided_slice %147 {offsets = [0, 64], sizes = [8, 64], strides = [1, 1]} : vector<8x256xf32> to vector<8x64xf32>
    %150 = vector.extract_strided_slice %147 {offsets = [0, 128], sizes = [8, 64], strides = [1, 1]} : vector<8x256xf32> to vector<8x64xf32>
    %151 = vector.extract_strided_slice %147 {offsets = [0, 192], sizes = [8, 64], strides = [1, 1]} : vector<8x256xf32> to vector<8x64xf32>
    %152 = arith.mulf %149, %131 : vector<8x64xf32>
    %153 = arith.mulf %148, %150 : vector<8x64xf32>
    %154 = arith.addf %152, %153 : vector<8x64xf32>
    %155 = math.tanh %154 : vector<8x64xf32>
    %156 = arith.mulf %151, %155 : vector<8x64xf32>
    %c40 = arith.constant 40 : index
    %c0_43 = arith.constant 0 : index
    %157 = vector.load %arg4[%c40, %c0_43] : memref<64x256xf32, #tpu.memory_space<vmem>>, vector<8x256xf32>
    %158 = arith.truncf %156 : vector<8x64xf32> to vector<8x64xbf16>
    %cst_44 = arith.constant dense<0.000000e+00> : vector<8x256xf32>
    %159 = tpu.matmul %158, %1, %cst_44 {dimension_numbers = #tpu.dot_dimension_numbers<[1], [0], [0], [1], [0, 0, 1, 1], [], []>} : vector<8x64xbf16>, vector<64x256xbf16>, vector<8x256xf32> -> vector<8x256xf32>
    %160 = arith.addf %157, %159 : vector<8x256xf32>
    %161 = arith.negf %160 : vector<8x256xf32>
    %162 = math.exp %161 : vector<8x256xf32>
    %cst_45 = arith.constant 1.000000e+00 : f32
    %163 = vector.broadcast %cst_45 : f32 to vector<8x256xf32>
    %164 = arith.addf %163, %162 : vector<8x256xf32>
    %165 = arith.divf %163, %164 : vector<8x256xf32>
    %cst_46 = arith.constant 2.000000e+00 : f32
    %166 = vector.broadcast %cst_46 : f32 to vector<8x256xf32>
    %167 = arith.mulf %166, %165 : vector<8x256xf32>
    %cst_47 = arith.constant 1.000000e+00 : f32
    %168 = vector.broadcast %cst_47 : f32 to vector<8x256xf32>
    %169 = arith.subf %167, %168 : vector<8x256xf32>
    %170 = arith.select %43, %169, %165 : vector<8x256xi1>, vector<8x256xf32>
    %171 = vector.extract_strided_slice %170 {offsets = [0, 0], sizes = [8, 64], strides = [1, 1]} : vector<8x256xf32> to vector<8x64xf32>
    %172 = vector.extract_strided_slice %170 {offsets = [0, 64], sizes = [8, 64], strides = [1, 1]} : vector<8x256xf32> to vector<8x64xf32>
    %173 = vector.extract_strided_slice %170 {offsets = [0, 128], sizes = [8, 64], strides = [1, 1]} : vector<8x256xf32> to vector<8x64xf32>
    %174 = vector.extract_strided_slice %170 {offsets = [0, 192], sizes = [8, 64], strides = [1, 1]} : vector<8x256xf32> to vector<8x64xf32>
    %175 = arith.mulf %172, %154 : vector<8x64xf32>
    %176 = arith.mulf %171, %173 : vector<8x64xf32>
    %177 = arith.addf %175, %176 : vector<8x64xf32>
    %178 = math.tanh %177 : vector<8x64xf32>
    %179 = arith.mulf %174, %178 : vector<8x64xf32>
    %c48 = arith.constant 48 : index
    %c0_48 = arith.constant 0 : index
    %180 = vector.load %arg4[%c48, %c0_48] : memref<64x256xf32, #tpu.memory_space<vmem>>, vector<8x256xf32>
    %181 = arith.truncf %179 : vector<8x64xf32> to vector<8x64xbf16>
    %cst_49 = arith.constant dense<0.000000e+00> : vector<8x256xf32>
    %182 = tpu.matmul %181, %1, %cst_49 {dimension_numbers = #tpu.dot_dimension_numbers<[1], [0], [0], [1], [0, 0, 1, 1], [], []>} : vector<8x64xbf16>, vector<64x256xbf16>, vector<8x256xf32> -> vector<8x256xf32>
    %183 = arith.addf %180, %182 : vector<8x256xf32>
    %184 = arith.negf %183 : vector<8x256xf32>
    %185 = math.exp %184 : vector<8x256xf32>
    %cst_50 = arith.constant 1.000000e+00 : f32
    %186 = vector.broadcast %cst_50 : f32 to vector<8x256xf32>
    %187 = arith.addf %186, %185 : vector<8x256xf32>
    %188 = arith.divf %186, %187 : vector<8x256xf32>
    %cst_51 = arith.constant 2.000000e+00 : f32
    %189 = vector.broadcast %cst_51 : f32 to vector<8x256xf32>
    %190 = arith.mulf %189, %188 : vector<8x256xf32>
    %cst_52 = arith.constant 1.000000e+00 : f32
    %191 = vector.broadcast %cst_52 : f32 to vector<8x256xf32>
    %192 = arith.subf %190, %191 : vector<8x256xf32>
    %193 = arith.select %43, %192, %188 : vector<8x256xi1>, vector<8x256xf32>
    %194 = vector.extract_strided_slice %193 {offsets = [0, 0], sizes = [8, 64], strides = [1, 1]} : vector<8x256xf32> to vector<8x64xf32>
    %195 = vector.extract_strided_slice %193 {offsets = [0, 64], sizes = [8, 64], strides = [1, 1]} : vector<8x256xf32> to vector<8x64xf32>
    %196 = vector.extract_strided_slice %193 {offsets = [0, 128], sizes = [8, 64], strides = [1, 1]} : vector<8x256xf32> to vector<8x64xf32>
    %197 = vector.extract_strided_slice %193 {offsets = [0, 192], sizes = [8, 64], strides = [1, 1]} : vector<8x256xf32> to vector<8x64xf32>
    %198 = arith.mulf %195, %177 : vector<8x64xf32>
    %199 = arith.mulf %194, %196 : vector<8x64xf32>
    %200 = arith.addf %198, %199 : vector<8x64xf32>
    %201 = math.tanh %200 : vector<8x64xf32>
    %202 = arith.mulf %197, %201 : vector<8x64xf32>
    %c56 = arith.constant 56 : index
    %c0_53 = arith.constant 0 : index
    %203 = vector.load %arg4[%c56, %c0_53] : memref<64x256xf32, #tpu.memory_space<vmem>>, vector<8x256xf32>
    %204 = arith.truncf %202 : vector<8x64xf32> to vector<8x64xbf16>
    %cst_54 = arith.constant dense<0.000000e+00> : vector<8x256xf32>
    %205 = tpu.matmul %204, %1, %cst_54 {dimension_numbers = #tpu.dot_dimension_numbers<[1], [0], [0], [1], [0, 0, 1, 1], [], []>} : vector<8x64xbf16>, vector<64x256xbf16>, vector<8x256xf32> -> vector<8x256xf32>
    %206 = arith.addf %203, %205 : vector<8x256xf32>
    %207 = arith.negf %206 : vector<8x256xf32>
    %208 = math.exp %207 : vector<8x256xf32>
    %cst_55 = arith.constant 1.000000e+00 : f32
    %209 = vector.broadcast %cst_55 : f32 to vector<8x256xf32>
    %210 = arith.addf %209, %208 : vector<8x256xf32>
    %211 = arith.divf %209, %210 : vector<8x256xf32>
    %cst_56 = arith.constant 2.000000e+00 : f32
    %212 = vector.broadcast %cst_56 : f32 to vector<8x256xf32>
    %213 = arith.mulf %212, %211 : vector<8x256xf32>
    %cst_57 = arith.constant 1.000000e+00 : f32
    %214 = vector.broadcast %cst_57 : f32 to vector<8x256xf32>
    %215 = arith.subf %213, %214 : vector<8x256xf32>
    %216 = arith.select %43, %215, %211 : vector<8x256xi1>, vector<8x256xf32>
    %217 = vector.extract_strided_slice %216 {offsets = [0, 0], sizes = [8, 64], strides = [1, 1]} : vector<8x256xf32> to vector<8x64xf32>
    %218 = vector.extract_strided_slice %216 {offsets = [0, 64], sizes = [8, 64], strides = [1, 1]} : vector<8x256xf32> to vector<8x64xf32>
    %219 = vector.extract_strided_slice %216 {offsets = [0, 128], sizes = [8, 64], strides = [1, 1]} : vector<8x256xf32> to vector<8x64xf32>
    %220 = vector.extract_strided_slice %216 {offsets = [0, 192], sizes = [8, 64], strides = [1, 1]} : vector<8x256xf32> to vector<8x64xf32>
    %221 = arith.mulf %218, %200 : vector<8x64xf32>
    %222 = arith.mulf %217, %219 : vector<8x64xf32>
    %223 = arith.addf %221, %222 : vector<8x64xf32>
    %224 = math.tanh %223 : vector<8x64xf32>
    %225 = arith.mulf %220, %224 : vector<8x64xf32>
    %226 = arith.truncf %225 : vector<8x64xf32> to vector<8x64xbf16>
    %cst_58 = arith.constant dense<0.000000e+00> : vector<8x128xf32>
    %227 = tpu.matmul %226, %17, %cst_58 {dimension_numbers = #tpu.dot_dimension_numbers<[1], [0], [0], [1], [0, 0, 1, 1], [], []>} : vector<8x64xbf16>, vector<64x128xbf16>, vector<8x128xf32> -> vector<8x128xf32>
    %228 = vector.broadcast %19 : vector<1x128xf32> to vector<8x128xf32>
    %229 = arith.addf %227, %228 : vector<8x128xf32>
    %c0_59 = arith.constant 0 : index
    %c0_60 = arith.constant 0 : index
    %230 = vector.load %arg3[%c0_59, %c0_60] : memref<8x128xf32, #tpu.memory_space<vmem>>, vector<8x128xf32>
    tpu.vector_store %arg3[%c0_59, %c0_60], %229 {strides = array<i32>} : memref<8x128xf32, #tpu.memory_space<vmem>>, vector<8x128xf32>,
    return
  }
  func.func @transform_0(%arg0: i32) -> (i32, i32) {
    %c0_i32 = arith.constant 0 : i32
    %c0_i32_0 = arith.constant 0 : i32
    return %arg0, %c0_i32 : i32, i32
  }
  func.func @transform_1(%arg0: i32) -> (i32, i32) {
    %c0_i32 = arith.constant 0 : i32
    %c0_i32_0 = arith.constant 0 : i32
    %c0_i32_1 = arith.constant 0 : i32
    return %c0_i32, %c0_i32_0 : i32, i32
  }
  func.func @transform_2(%arg0: i32) -> (i32, i32) {
    %c0_i32 = arith.constant 0 : i32
    %c0_i32_0 = arith.constant 0 : i32
    return %arg0, %c0_i32 : i32, i32
  }
}

</mosaic_0001>

<llo_original>
// kernel: tpu_custom_call.1
$region0: #{tpu_custom_call.1}
  #allocation0 [shape = 'u32[]', space=smem, size = 0x4, offset = 0x4, fixed_abs, tag = 'smem constant byte address 0x4 - core index']
  #allocation1 [shape = 'u32[144,128]{1,0:T(1,128)}', space=vmem, size = 0x12000, scoped, tag = 'internal scratch']
  #allocation2 [shape = 'f32[64,256]{1,0:T(8,128)}', space=vmem, size = 0x10000, scoped, tag = 'scratch operand']
  %s0 = inlined_call_operand.vmem [shape: f32[512,16], index: 0, kind: input, shape index: {}]
  %s1 = inlined_call_operand.hbm [shape: f32[304,256], index: 1, kind: input, shape index: {}]
  %s2 = inlined_call_operand.hbm [shape: f32[64,128], index: 2, kind: output, shape index: {}]
  %s3 = sld [smem:[#allocation0]]
  $region45: #{tpu_custom_call.1} parent=0
    _
  %s5 = ssub.s32 1, %s3
  %s6 = scalar_select 0, %s5, %s3
  $region1: #{tpu_custom_call.1} parent=0
    #allocation3 [shape = 'u8[311296]{0}', space=vmem, size = 0x4c000, scoped, tag = 'input window, operand 1, single buffered']
    #allocation4 [shape = 's32[2]{0}', space=sflag, size = 0x8, scoped, tag = 'scoped memory for tpu_custom_call.1']
    #allocation5 [shape = 's32[2]{0}', space=sflag, size = 0x8, scoped, tag = 'scoped memory for tpu_custom_call.1']
    #allocation6 [shape = 'u8[8192]{0}', space=vmem, size = 0x2000, scoped, tag = 'output window, operand 0']
    %7 = vsyncpa [#allocation4], 0
    %8 = vsyncpa [#allocation5], 0
    %s9 = scalar_lea.sflag [#allocation5], 1
    %10 = vsyncpa %s9, 0
    loop: start=0, step=1, limit=10
    $region2: #{tpu_custom_call.1} parent=1 // loop_pre_header
      _
    $region3: #{tpu_custom_call.1} parent=1 // loop_header
      %s12 = sphi 0, %s16
      %p13 = scmp.ge.s32.totalorder %s12, 10
      %s22 = sphi 0, %s24
      %s25 = sphi 0, %s22
      %s26 = sphi 0, %s25
      %s42 = sphi 0, %s26
      %s46 = sphi 0, %s46
      %s48 = sphi 0, %s46
      %s49 = sphi 0, %s48
      %s63 = sphi 0, %s49
      %s69 = sphi 0, %s71
      %s72 = sphi 0, %s69
      %s73 = sphi 0, %s72
      %s89 = sphi 0, %s73
    $region4: #{tpu_custom_call.1} parent=1 // loop_header_branch
      %15 = sbr.rel (%p13) target = $region8
    $region5: #{tpu_custom_call.1} parent=1 // loop_body
      %s17 = ssub.s32 %s12, 1
      %s18 = ssub.s32 %s12, 2
      %s19 = sadd.s32 %s12, 1
      %s20 = ssub.s32 %s12, %s19
      %p21 = scmp.eq.s32.totalorder %s20, 0
      %s23 = sadd.s32 %s22, 1
      %s24 = scalar_select %p21, %s22, %s23
      %p27 = pneg %p21
      %p28 = scmp.eq.s32.totalorder %s12, 7
      %p29 = por %p27, %p28
      %p30 = scmp.ne.s32.totalorder %s22, %s25
      %p31 = scmp.eq.s32.totalorder %s12, 0
      %p32 = por %p30, %p31
      %p33 = scmp.ne.s32.totalorder %s22, %s25
      %p34 = scmp.eq.s32.totalorder %s17, 7
      %p35 = por %p33, %p34
      %p36 = scmp.ne.s32.totalorder %s25, %s26
      %p37 = scmp.eq.s32.totalorder %s17, 0
      %p38 = por %p36, %p37
      %p39 = scmp.ne.s32.totalorder %s25, %s26
      %p40 = scmp.eq.s32.totalorder %s18, 7
      %p41 = por %p39, %p40
      %p43 = scmp.ne.s32.totalorder %s26, %s42
      %p44 = scmp.eq.s32.totalorder %s18, 0
      %p45 = por %p43, %p44
      %s47 = sadd.s32 %s46, 1
      %p50 = scmp.eq.s32.totalorder %s12, 7
      %p51 = scmp.ne.s32.totalorder %s46, %s48
      %p52 = scmp.eq.s32.totalorder %s12, 0
      %p53 = por %p51, %p52
      %p54 = scmp.ne.s32.totalorder %s46, %s48
      %p55 = scmp.eq.s32.totalorder %s17, 7
      %p56 = por %p54, %p55
      %p57 = scmp.ne.s32.totalorder %s48, %s49
      %p58 = scmp.eq.s32.totalorder %s17, 0
      %p59 = por %p57, %p58
      %p60 = scmp.ne.s32.totalorder %s48, %s49
      %p61 = scmp.eq.s32.totalorder %s18, 7
      %p62 = por %p60, %p61
      %p64 = scmp.ne.s32.totalorder %s49, %s63
      %p65 = scmp.eq.s32.totalorder %s18, 0
      %p66 = por %p64, %p65
      %s67 = ssub.s32 %s12, %s19
      %p68 = scmp.eq.s32.totalorder %s67, 0
      %s70 = sadd.s32 %s69, 1
      %s71 = scalar_select %p68, %s69, %s70
      %p74 = pneg %p68
      %p75 = scmp.eq.s32.totalorder %s12, 7
      %p76 = por %p74, %p75
      %p77 = scmp.ne.s32.totalorder %s69, %s72
      %p78 = scmp.eq.s32.totalorder %s12, 0
      %p79 = por %p77, %p78
      %p80 = scmp.ne.s32.totalorder %s69, %s72
      %p81 = scmp.eq.s32.totalorder %s17, 7
      %p82 = por %p80, %p81
      %p83 = scmp.ne.s32.totalorder %s72, %s73
      %p84 = scmp.eq.s32.totalorder %s17, 0
      %p85 = por %p83, %p84
      %p86 = scmp.ne.s32.totalorder %s72, %s73
      %p87 = scmp.eq.s32.totalorder %s18, 7
      %p88 = por %p86, %p87
      %p90 = scmp.ne.s32.totalorder %s73, %s89
      %p91 = scmp.eq.s32.totalorder %s18, 0
      %p92 = por %p90, %p91
      %p93 = scmp.le.s32.totalorder 1, %s12
      %p94 = scmp.lt.s32.totalorder %s12, 9
      %p95 = pnand %p93, %p94
      %p96 = pneg %p95
      // Predicated region
      $region9: #{tpu_custom_call.1} parent=5 // pred_check
        _
      $region10: #{tpu_custom_call.1} parent=5 // pred_check_branch
        %98 = sbr.rel (%p95) target = $region12
      $region11: #{tpu_custom_call.1} parent=5 // pred_region
        %s99 = ssub.s32 %s12, 1
        // Predicated region
        $region13: #{tpu_custom_call.1} parent=11 // pred_check
          %p100 = pneg %p59
        $region14: #{tpu_custom_call.1} parent=11 // pred_check_branch
          %102 = sbr.rel (%p100) target = $region16
        $region15: #{tpu_custom_call.1} parent=11 // pred_region
          %s104 = ssub.s32 9728, 9728
          %105 = vsyncadd [#allocation4], %s104
          %s106 = sshll.u32 [#allocation3], 4
          %s107 = int_to_ptr.vmem [resolvable:$true] %s106
          %112 = dma.hbm_to_vmem [thread:$0]  %s1, 9728, %s107, [#allocation4], 256, 256, 16
        $region16: #{tpu_custom_call.1} parent=11 // pred_fallthru
          _
      $region12: #{tpu_custom_call.1} parent=5 // pred_fallthru
        _
      %p113 = scmp.lt.s32.totalorder %s12, 8
      // Predicated region
      $region17: #{tpu_custom_call.1} parent=5 // pred_check
        %p114 = pneg %p113
      $region18: #{tpu_custom_call.1} parent=5 // pred_check_branch
        %116 = sbr.rel (%p114) target = $region20
      $region19: #{tpu_custom_call.1} parent=5 // pred_region
        // Predicated region
        $region21: #{tpu_custom_call.1} parent=19 // pred_check
          %p117 = pneg %p32
        $region22: #{tpu_custom_call.1} parent=19 // pred_check_branch
          %119 = sbr.rel (%p117) target = $region24
        $region23: #{tpu_custom_call.1} parent=19 // pred_region
          %s120 = smul.u32 8, %s12
          %p121 = scmp.lt.s32.totalorder %s120, 63
          %s122 = scalar_select %p121, %s120, 63
          %s123 = smul.addr %s122, 8
          %s124 = scalar_lea.vmem %s0, %s123
          %s125 = smul.u32 8, %s12
        $region24: #{tpu_custom_call.1} parent=19 // pred_fallthru
          _
      $region20: #{tpu_custom_call.1} parent=5 // pred_fallthru
        _
      %p126 = scmp.le.s32.totalorder 1, %s12
      %p127 = scmp.lt.s32.totalorder %s12, 9
      %p128 = pnand %p126, %p127
      %p129 = pneg %p128
      // Predicated region
      $region25: #{tpu_custom_call.1} parent=5 // pred_check
        _
      $region26: #{tpu_custom_call.1} parent=5 // pred_check_branch
        %131 = sbr.rel (%p128) target = $region28
      $region27: #{tpu_custom_call.1} parent=5 // pred_region
        %s132 = ssub.s32 %s12, 1
        // Predicated region
        $region29: #{tpu_custom_call.1} parent=27 // pred_check
          %p133 = pneg %p59
        $region30: #{tpu_custom_call.1} parent=27 // pred_check_branch
          %135 = sbr.rel (%p133) target = $region32
        $region31: #{tpu_custom_call.1} parent=27 // pred_region
          %136 = dma.done [#allocation4], 9728
        $region32: #{tpu_custom_call.1} parent=27 // pred_fallthru
          _
        %s137 = smul.u32 8, %s17
        %p138 = scmp.lt.s32.totalorder %s137, 63
        %s139 = scalar_select %p138, %s137, 63
        %s140 = smul.addr %s139, 8
        %s141 = scalar_lea.vmem %s0, %s140
        %p142 = pneg %p38
        %p143 = pneg %p35
        %p144 = pneg %p59
        %p145 = pneg %p56
        %p146 = pneg %p85
        %p147 = pneg %p82
        %s148 = sand.u32 %s72, 1
        %s149 = scalar_lea.sflag [#allocation5], %s148
        %s150 = sand.u32 %s72, 1
        %s151 = smul.addr %s150, 8
        %s152 = scalar_lea.vmem [#allocation6], %s151
        %s153 = smul.u32 8, %s17
        %p154 = scmp.lt.s32.totalorder %s153, 63
        %s155 = scalar_select %p154, %s153, 63
        %s156 = smul.addr %s155, 8
        %s157 = scalar_lea.vmem %s0, %s156
        %s158 = smul.u32 8, %s17
        %v160 = vld [vmem:[#allocation3] sm:$0xff]
        %v161 = vld [vmem:[#allocation3 + $0x8] sm:$0xff]
        %v162 = vld [vmem:[#allocation3 + $0x10] sm:$0xff]
        %v163 = vld [vmem:[#allocation3 + $0x18] sm:$0xff]
        %v164 = vld [vmem:[#allocation3 + $0x20] sm:$0xff]
        %v165 = vld [vmem:[#allocation3 + $0x28] sm:$0xff]
        %v166 = vld [vmem:[#allocation3 + $0x30] sm:$0xff]
        %v167 = vld [vmem:[#allocation3 + $0x38] sm:$0xff]
        %v168 = vld [vmem:[#allocation3 + $0x40] sm:$0xff]
        %v169 = vld [vmem:[#allocation3 + $0x48] sm:$0xff]
        %v170 = vld [vmem:[#allocation3 + $0x50] sm:$0xff]
        %v171 = vld [vmem:[#allocation3 + $0x58] sm:$0xff]
        %v172 = vld [vmem:[#allocation3 + $0x60] sm:$0xff]
        %v173 = vld [vmem:[#allocation3 + $0x68] sm:$0xff]
        %v174 = vld [vmem:[#allocation3 + $0x70] sm:$0xff]
        %v175 = vld [vmem:[#allocation3 + $0x78] sm:$0xff]
        %v176 = vpack.c.bf16 %v162, %v160
        %v177 = vpack.c.bf16 %v163, %v161
        %v178 = vpack.c.bf16 %v166, %v164
        %v179 = vpack.c.bf16 %v167, %v165
        %v180 = vpack.c.bf16 %v170, %v168
        %v181 = vpack.c.bf16 %v171, %v169
        %v182 = vpack.c.bf16 %v174, %v172
        %v183 = vpack.c.bf16 %v175, %v173
        %v184 = vld [vmem:[#allocation3 + $0x80] sm:$0xff]
        %v185 = vld [vmem:[#allocation3 + $0x88] sm:$0xff]
        %v186 = vld [vmem:[#allocation3 + $0x90] sm:$0xff]
        %v187 = vld [vmem:[#allocation3 + $0x98] sm:$0xff]
        %v188 = vld [vmem:[#allocation3 + $0xa0] sm:$0xff]
        %v189 = vld [vmem:[#allocation3 + $0xa8] sm:$0xff]
        %v190 = vld [vmem:[#allocation3 + $0xb0] sm:$0xff]
        %v191 = vld [vmem:[#allocation3 + $0xb8] sm:$0xff]
        %v192 = vld [vmem:[#allocation3 + $0xc0] sm:$0xff]
        %v193 = vld [vmem:[#allocation3 + $0xc8] sm:$0xff]
        %v194 = vld [vmem:[#allocation3 + $0xd0] sm:$0xff]
        %v195 = vld [vmem:[#allocation3 + $0xd8] sm:$0xff]
        %v196 = vld [vmem:[#allocation3 + $0xe0] sm:$0xff]
        %v197 = vld [vmem:[#allocation3 + $0xe8] sm:$0xff]
        %v198 = vld [vmem:[#allocation3 + $0xf0] sm:$0xff]
        %v199 = vld [vmem:[#allocation3 + $0xf8] sm:$0xff]
        %v200 = vpack.c.bf16 %v186, %v184
        %v201 = vpack.c.bf16 %v187, %v185
        %v202 = vpack.c.bf16 %v190, %v188
        %v203 = vpack.c.bf16 %v191, %v189
        %v204 = vpack.c.bf16 %v194, %v192
        %v205 = vpack.c.bf16 %v195, %v193
        %v206 = vpack.c.bf16 %v198, %v196
        %v207 = vpack.c.bf16 %v199, %v197
        %s208 = scalar_lea.vmem [#allocation3], 256
        %v209 = vld [vmem:[%s208] ss:$8 sm:$0x3]
        %v210 = vld [vmem:[#allocation3 + $0x110] sm:$0xff]
        %v211 = vld [vmem:[#allocation3 + $0x120] sm:$0xff]
        %v212 = vpack.c.bf16 %v211, %v210
        %s213 = scalar_lea.vmem [#allocation3], 304
        %v214 = vld [vmem:[%s213] ss:$8 sm:$0x3]
        %v215 = vld [vmem:[#allocation3 + $0x140] sm:$0xff]
        %v216 = vld [vmem:[#allocation3 + $0x150] sm:$0xff]
        %v217 = vld [vmem:[#allocation3 + $0x160] sm:$0xff]
        %v218 = vld [vmem:[#allocation3 + $0x170] sm:$0xff]
        %v219 = vld [vmem:[#allocation3 + $0x180] sm:$0xff]
        %v220 = vld [vmem:[#allocation3 + $0x190] sm:$0xff]
        %v221 = vld [vmem:[#allocation3 + $0x1a0] sm:$0xff]
        %v222 = vld [vmem:[#allocation3 + $0x1b0] sm:$0xff]
        %v223 = vpack.c.bf16 %v216, %v215
        %v224 = vpack.c.bf16 %v218, %v217
        %v225 = vpack.c.bf16 %v220, %v219
        %v226 = vpack.c.bf16 %v222, %v221
        %s227 = scalar_lea.vmem [#allocation3], 448
        %v228 = vld [vmem:[%s227] ss:$8 sm:$0x3]
        %v229 = vld [vmem:[#allocation3 + $0x1d0] sm:$0xff]
        %v230 = vld [vmem:[#allocation3 + $0x1e0] sm:$0xff]
        %v231 = vld [vmem:[#allocation3 + $0x1f0] sm:$0xff]
        %v232 = vld [vmem:[#allocation3 + $0x200] sm:$0xff]
        %v233 = vld [vmem:[#allocation3 + $0x210] sm:$0xff]
        %v234 = vld [vmem:[#allocation3 + $0x220] sm:$0xff]
        %v235 = vld [vmem:[#allocation3 + $0x230] sm:$0xff]
        %v236 = vld [vmem:[#allocation3 + $0x240] sm:$0xff]
        %v237 = vpack.c.bf16 %v230, %v229
        %v238 = vpack.c.bf16 %v232, %v231
        %v239 = vpack.c.bf16 %v234, %v233
        %v240 = vpack.c.bf16 %v236, %v235
        %s241 = scalar_lea.vmem [#allocation3], 592
        %v242 = vld [vmem:[%s241] ss:$8 sm:$0x3]
        %v243 = vld [vmem:[%s157] sm:$0xff]
        %v244 = vld [vmem:[%s157 + $0x8] sm:$0xff]
        %v245 = vld [vmem:[%s157 + $0x10] sm:$0xff]
        %v246 = vld [vmem:[%s157 + $0x18] sm:$0xff]
        %v247 = vld [vmem:[%s157 + $0x20] sm:$0xff]
        %v248 = vld [vmem:[%s157 + $0x28] sm:$0xff]
        %v249 = vld [vmem:[%s157 + $0x30] sm:$0xff]
        %v250 = vld [vmem:[%s157 + $0x38] sm:$0xff]
        %v251 = vpack.c.bf16 %v244, %v243
        %v252 = vpack.c.bf16 %v246, %v245
        %v253 = vpack.c.bf16 %v248, %v247
        %v254 = vpack.c.bf16 %v250, %v249
        %v256 = vlaneseq
        %v257 = vshrl.u32 %v256, 7
        %v258 = vsub.s32 0, %v257
        %v259 = vrot.slane %v214, %v258
        %vm261 = vcmask 130048
        %v263 = vsel %vm261, %v251, 0
        %v266 = vsel %vm261, %v252, 0
        %v269 = vsel %vm261, %v253, 0
        %v272 = vsel %vm261, %v254, 0
        %274 = vmatprep.subr.bf16.mxu0 0
        %275 = vmatpush1.bf16.msra.mxu0 %v212
        %276 = vmatprep.subr.bf16.mxu0 0
        %277 = vmatpush1.bf16.msra.mxu0 0
        %278 = vmatprep.subr.bf16.mxu0 0
        %279 = vmatpush1.bf16.msra.mxu0 0
        %280 = vmatprep.subr.bf16.mxu0 0
        %281 = vmatpush1.bf16.msra.mxu0 0
        %282 = vmatprep.subr.bf16.mxu0 0
        %283 = vmatpush1.bf16.msra.mxu0 0
        %284 = vmatprep.subr.bf16.mxu0 0
        %285 = vmatpush1.bf16.msra.mxu0 0
        %286 = vmatprep.subr.bf16.mxu0 0
        %287 = vmatpush1.bf16.msra.mxu0 0
        %288 = vmatprep.subr.bf16.mxu0 0
        %289 = vmatpush1.bf16.msra.mxu0 0
        %290 = vmatprep.subr.bf16.mxu0 0
        %291 = vmatpush1.bf16.msra.mxu0 0
        %292 = vmatprep.subr.bf16.mxu0 0
        %293 = vmatpush1.bf16.msra.mxu0 0
        %294 = vmatprep.subr.bf16.mxu0 0
        %295 = vmatpush1.bf16.msra.mxu0 0
        %296 = vmatprep.subr.bf16.mxu0 0
        %297 = vmatpush1.bf16.msra.mxu0 0
        %298 = vmatprep.subr.bf16.mxu0 0
        %299 = vmatpush1.bf16.msra.mxu0 0
        %300 = vmatprep.subr.bf16.mxu0 0
        %301 = vmatpush1.bf16.msra.mxu0 0
        %302 = vmatprep.subr.bf16.mxu0 0
        %303 = vmatpush1.bf16.msra.mxu0 0
        %304 = vmatprep.subr.bf16.mxu0 0
        %305 = vmatpush1.bf16.msra.mxu0 0
        %306 = vmatprep.mubr.bf16.mxu0 0
        %307 = vmatmul.mubr.bf16.gmra.mrb[0].mxu0 %v263
        %v308 = vpop.f32.mrb[0].mxu0
        %v309 = vadd.f32 %v259, %v308
        %v310 = vpop.f32.mrb[0].mxu0
        %v311 = vpop.f32.mrb[0].mxu0
        %v312 = vadd.f32 %v259, %v311
        %v313 = vpop.f32.mrb[0].mxu0
        %314 = vmatprep.mubr.bf16.mxu0 0
        %315 = vmatmul.mubr.bf16.gmra.mrb[0].mxu0 %v266
        %v316 = vpop.f32.mrb[0].mxu0
        %v317 = vadd.f32 %v259, %v316
        %v318 = vpop.f32.mrb[0].mxu0
        %v319 = vpop.f32.mrb[0].mxu0
        %v320 = vadd.f32 %v259, %v319
        %v321 = vpop.f32.mrb[0].mxu0
        %322 = vmatprep.mubr.bf16.mxu0 0
        %323 = vmatmul.mubr.bf16.gmra.mrb[0].mxu0 %v269
        %v324 = vpop.f32.mrb[0].mxu0
        %v325 = vadd.f32 %v259, %v324
        %v326 = vpop.f32.mrb[0].mxu0
        %v327 = vpop.f32.mrb[0].mxu0
        %v328 = vadd.f32 %v259, %v327
        %v329 = vpop.f32.mrb[0].mxu0
        %330 = vmatprep.mubr.bf16.mxu0 0
        %331 = vmatmul.mubr.bf16.gmra.mrb[0].mxu0 %v272
        %v332 = vpop.f32.mrb[0].mxu0
        %v333 = vadd.f32 %v259, %v332
        %v334 = vpop.f32.mrb[0].mxu0
        %v335 = vpop.f32.mrb[0].mxu0
        %v336 = vadd.f32 %v259, %v335
        %v337 = vpop.f32.mrb[0].mxu0
        %338 = vdwg.mxu0
        %v339 = vmax.f32 %v309, 0.0
        %v340 = vmax.f32 %v312, 0.0
        %v341 = vmax.f32 %v317, 0.0
        %v342 = vmax.f32 %v320, 0.0
        %v343 = vmax.f32 %v325, 0.0
        %v344 = vmax.f32 %v328, 0.0
        %v345 = vmax.f32 %v333, 0.0
        %v346 = vmax.f32 %v336, 0.0
        %v347 = vpack.c.bf16 %v340, %v339
        %v348 = vpack.c.bf16 %v342, %v341
        %v349 = vpack.c.bf16 %v344, %v343
        %v350 = vpack.c.bf16 %v346, %v345
        %v352 = vlaneseq
        %v353 = vshrl.u32 %v352, 7
        %v354 = vsub.s32 0, %v353
        %v355 = vrot.slane %v228, %v354
        %vm357 = vcmask 523264
        %v359 = vsel %vm357, %v347, 0
        %v362 = vsel %vm357, %v348, 0
        %v365 = vsel %vm357, %v349, 0
        %v368 = vsel %vm357, %v350, 0
        %370 = vmatprep.subr.bf16.mxu0 0
        %371 = vmatpush1.bf16.msra.mxu0 %v223
        %372 = vmatprep.subr.bf16.mxu0 0
        %373 = vmatpush1.bf16.msra.mxu0 %v224
        %374 = vmatprep.subr.bf16.mxu0 0
        %375 = vmatpush1.bf16.msra.mxu0 %v225
        %376 = vmatprep.subr.bf16.mxu0 0
        %377 = vmatpush1.bf16.msra.mxu0 %v226
        %378 = vmatprep.subr.bf16.mxu0 0
        %379 = vmatpush1.bf16.msra.mxu0 0
        %380 = vmatprep.subr.bf16.mxu0 0
        %381 = vmatpush1.bf16.msra.mxu0 0
        %382 = vmatprep.subr.bf16.mxu0 0
        %383 = vmatpush1.bf16.msra.mxu0 0
        %384 = vmatprep.subr.bf16.mxu0 0
        %385 = vmatpush1.bf16.msra.mxu0 0
        %386 = vmatprep.subr.bf16.mxu0 0
        %387 = vmatpush1.bf16.msra.mxu0 0
        %388 = vmatprep.subr.bf16.mxu0 0
        %389 = vmatpush1.bf16.msra.mxu0 0
        %390 = vmatprep.subr.bf16.mxu0 0
        %391 = vmatpush1.bf16.msra.mxu0 0
        %392 = vmatprep.subr.bf16.mxu0 0
        %393 = vmatpush1.bf16.msra.mxu0 0
        %394 = vmatprep.subr.bf16.mxu0 0
        %395 = vmatpush1.bf16.msra.mxu0 0
        %396 = vmatprep.subr.bf16.mxu0 0
        %397 = vmatpush1.bf16.msra.mxu0 0
        %398 = vmatprep.subr.bf16.mxu0 0
        %399 = vmatpush1.bf16.msra.mxu0 0
        %400 = vmatprep.subr.bf16.mxu0 0
        %401 = vmatpush1.bf16.msra.mxu0 0
        %402 = vmatprep.mubr.bf16.mxu0 0
        %403 = vmatmul.mubr.bf16.gmra.mrb[0].mxu0 %v359
        %v404 = vpop.f32.mrb[0].mxu0
        %v405 = vadd.f32 %v355, %v404
        %v406 = vpop.f32.mrb[0].mxu0
        %v407 = vpop.f32.mrb[0].mxu0
        %v408 = vadd.f32 %v355, %v407
        %v409 = vpop.f32.mrb[0].mxu0
        %410 = vmatprep.mubr.bf16.mxu0 0
        %411 = vmatmul.mubr.bf16.gmra.mrb[0].mxu0 %v362
        %v412 = vpop.f32.mrb[0].mxu0
        %v413 = vadd.f32 %v355, %v412
        %v414 = vpop.f32.mrb[0].mxu0
        %v415 = vpop.f32.mrb[0].mxu0
        %v416 = vadd.f32 %v355, %v415
        %v417 = vpop.f32.mrb[0].mxu0
        %418 = vmatprep.mubr.bf16.mxu0 0
        %419 = vmatmul.mubr.bf16.gmra.mrb[0].mxu0 %v365
        %v420 = vpop.f32.mrb[0].mxu0
        %v421 = vadd.f32 %v355, %v420
        %v422 = vpop.f32.mrb[0].mxu0
        %v423 = vpop.f32.mrb[0].mxu0
        %v424 = vadd.f32 %v355, %v423
        %v425 = vpop.f32.mrb[0].mxu0
        %426 = vmatprep.mubr.bf16.mxu0 0
        %427 = vmatmul.mubr.bf16.gmra.mrb[0].mxu0 %v368
        %v428 = vpop.f32.mrb[0].mxu0
        %v429 = vadd.f32 %v355, %v428
        %v430 = vpop.f32.mrb[0].mxu0
        %v431 = vpop.f32.mrb[0].mxu0
        %v432 = vadd.f32 %v355, %v431
        %v433 = vpop.f32.mrb[0].mxu0
        %434 = vdwg.mxu0
        %v435 = vmax.f32 %v405, 0.0
        %v436 = vmax.f32 %v408, 0.0
        %v437 = vmax.f32 %v413, 0.0
        %v438 = vmax.f32 %v416, 0.0
        %v439 = vmax.f32 %v421, 0.0
        %v440 = vmax.f32 %v424, 0.0
        %v441 = vmax.f32 %v429, 0.0
        %v442 = vmax.f32 %v432, 0.0
        %v443 = vpack.c.bf16 %v436, %v435
        %v444 = vpack.c.bf16 %v438, %v437
        %v445 = vpack.c.bf16 %v440, %v439
        %v446 = vpack.c.bf16 %v442, %v441
        %v448 = vlaneseq
        %v449 = vshrl.u32 %v448, 7
        %v450 = vsub.s32 0, %v449
        %v451 = vrot.slane %v209, %v450
        %v452 = vlaneseq
        %v453 = vshrl.u32 %v452, 7
        %v454 = vsub.s32 1, %v453
        %v455 = vrot.slane %v209, %v454
        %v459 = vsel %vm357, %v443, 0
        %v462 = vsel %vm357, %v444, 0
        %v465 = vsel %vm357, %v445, 0
        %v468 = vsel %vm357, %v446, 0
        %470 = vmatprep.subr.bf16.mxu0 %v201
        %471 = vmatpush1.bf16.msra.mxu0 %v200
        %472 = vmatprep.subr.bf16.mxu0 %v203
        %473 = vmatpush1.bf16.msra.mxu0 %v202
        %474 = vmatprep.subr.bf16.mxu0 %v205
        %475 = vmatpush1.bf16.msra.mxu0 %v204
        %476 = vmatprep.subr.bf16.mxu0 %v207
        %477 = vmatpush1.bf16.msra.mxu0 %v206
        %478 = vmatprep.subr.bf16.mxu0 0
        %479 = vmatpush1.bf16.msra.mxu0 0
        %480 = vmatprep.subr.bf16.mxu0 0
        %481 = vmatpush1.bf16.msra.mxu0 0
        %482 = vmatprep.subr.bf16.mxu0 0
        %483 = vmatpush1.bf16.msra.mxu0 0
        %484 = vmatprep.subr.bf16.mxu0 0
        %485 = vmatpush1.bf16.msra.mxu0 0
        %486 = vmatprep.subr.bf16.mxu0 0
        %487 = vmatpush1.bf16.msra.mxu0 0
        %488 = vmatprep.subr.bf16.mxu0 0
        %489 = vmatpush1.bf16.msra.mxu0 0
        %490 = vmatprep.subr.bf16.mxu0 0
        %491 = vmatpush1.bf16.msra.mxu0 0
        %492 = vmatprep.subr.bf16.mxu0 0
        %493 = vmatpush1.bf16.msra.mxu0 0
        %494 = vmatprep.subr.bf16.mxu0 0
        %495 = vmatpush1.bf16.msra.mxu0 0
        %496 = vmatprep.subr.bf16.mxu0 0
        %497 = vmatpush1.bf16.msra.mxu0 0
        %498 = vmatprep.subr.bf16.mxu0 0
        %499 = vmatpush1.bf16.msra.mxu0 0
        %500 = vmatprep.subr.bf16.mxu0 0
        %501 = vmatpush1.bf16.msra.mxu0 0
        %502 = vmatprep.mubr.bf16.mxu0 0
        %503 = vmatmul.mubr.bf16.gmra.mrb[0].mxu0 %v459
        %v504 = vpop.f32.mrb[0].mxu0
        %v505 = vadd.f32 %v451, %v504
        %v506 = vpop.f32.mrb[0].mxu0
        %v507 = vadd.f32 %v455, %v506
        %v508 = vpop.f32.mrb[0].mxu0
        %v509 = vadd.f32 %v451, %v508
        %v510 = vpop.f32.mrb[0].mxu0
        %v511 = vadd.f32 %v455, %v510
        %512 = vmatprep.mubr.bf16.mxu0 0
        %513 = vmatmul.mubr.bf16.gmra.mrb[0].mxu0 %v462
        %v514 = vpop.f32.mrb[0].mxu0
        %v515 = vadd.f32 %v451, %v514
        %v516 = vpop.f32.mrb[0].mxu0
        %v517 = vadd.f32 %v455, %v516
        %v518 = vpop.f32.mrb[0].mxu0
        %v519 = vadd.f32 %v451, %v518
        %v520 = vpop.f32.mrb[0].mxu0
        %v521 = vadd.f32 %v455, %v520
        %522 = vmatprep.mubr.bf16.mxu0 0
        %523 = vmatmul.mubr.bf16.gmra.mrb[0].mxu0 %v465
        %v524 = vpop.f32.mrb[0].mxu0
        %v525 = vadd.f32 %v451, %v524
        %v526 = vpop.f32.mrb[0].mxu0
        %v527 = vadd.f32 %v455, %v526
        %v528 = vpop.f32.mrb[0].mxu0
        %v529 = vadd.f32 %v451, %v528
        %v530 = vpop.f32.mrb[0].mxu0
        %v531 = vadd.f32 %v455, %v530
        %532 = vmatprep.mubr.bf16.mxu0 0
        %533 = vmatmul.mubr.bf16.gmra.mrb[0].mxu0 %v468
        %v534 = vpop.f32.mrb[0].mxu0
        %v535 = vadd.f32 %v451, %v534
        %v536 = vpop.f32.mrb[0].mxu0
        %v537 = vadd.f32 %v455, %v536
        %v538 = vpop.f32.mrb[0].mxu0
        %v539 = vadd.f32 %v451, %v538
        %v540 = vpop.f32.mrb[0].mxu0
        %v541 = vadd.f32 %v455, %v540
        %542 = vdwg.mxu0
        %543 = vst [vmem:[#allocation2] sm:$0xff] %v505
        %544 = vst [vmem:[#allocation2 + $0x8] sm:$0xff] %v507
        %545 = vst [vmem:[#allocation2 + $0x10] sm:$0xff] %v509
        %546 = vst [vmem:[#allocation2 + $0x18] sm:$0xff] %v511
        %547 = vst [vmem:[#allocation2 + $0x20] sm:$0xff] %v515
        %548 = vst [vmem:[#allocation2 + $0x28] sm:$0xff] %v517
        %549 = vst [vmem:[#allocation2 + $0x30] sm:$0xff] %v519
        %550 = vst [vmem:[#allocation2 + $0x38] sm:$0xff] %v521
        %551 = vst [vmem:[#allocation2 + $0x40] sm:$0xff] %v525
        %552 = vst [vmem:[#allocation2 + $0x48] sm:$0xff] %v527
        %553 = vst [vmem:[#allocation2 + $0x50] sm:$0xff] %v529
        %554 = vst [vmem:[#allocation2 + $0x58] sm:$0xff] %v531
        %555 = vst [vmem:[#allocation2 + $0x60] sm:$0xff] %v535
        %556 = vst [vmem:[#allocation2 + $0x68] sm:$0xff] %v537
        %557 = vst [vmem:[#allocation2 + $0x70] sm:$0xff] %v539
        %558 = vst [vmem:[#allocation2 + $0x78] sm:$0xff] %v541
        %v559 = vlaneseq
        %v560 = vand.u32 %v559, 127
        %v561 = vadd.s32 %v560, 128
        %vm562 = vcmp.ge.s32.totalorder %v560, 128
        %vm563 = vcmp.ge.s32.totalorder %v561, 128
        %vm564 = vcmp.lt.s32.totalorder %v560, 192
        %vm565 = vcmp.lt.s32.totalorder %v561, 192
        %vm566 = vmand %vm562, %vm564
        %vm567 = vmand %vm563, %vm565
        %v568 = vld [vmem:[#allocation2] sm:$0xff]
        %v569 = vld [vmem:[#allocation2 + $0x8] sm:$0xff]
        %v570 = vxor.u32 %v568, 2147483648
        %v571 = vxor.u32 %v569, 2147483648
        %v572 = vmul.f32 %v570, 1.442695
        %v573 = vpow.pop %v572
        %v574 = vmul.f32 %v571, 1.442695
        %v575 = vpow.pop %v574
        %v576 = vadd.f32 %v573, 1.0
        %v577 = vadd.f32 %v575, 1.0
        %v578 = vrcp.pop %v576
        %v579 = vmul.f32 1.0, %v578
        %v580 = vrcp.pop %v577
        %v581 = vmul.f32 1.0, %v580
        %v582 = vmul.f32 %v579, 2.0
        %v583 = vmul.f32 %v581, 2.0
        %v584 = vsub.f32 %v582, 1.0
        %v585 = vsub.f32 %v583, 1.0
        %v586 = vsel %vm566, %v584, %v579
        %v587 = vsel %vm567, %v585, %v581
        %v588 = vmul.f32 %v586, 0.0
        %v589 = vmul.f32 %v586, %v587
        %591 = vrot.lane.b32.xlu0 %v589, 64
        %v592 = vpop.permute.xlu0 %591
        %v594 = vadd.f32 %v588, %v592
        %v595 = vtanh.pop %v594
        %v596 = vmul.f32 %v587, %v595
        %v597 = vld [vmem:[#allocation2 + $0x10] sm:$0xff]
        %v598 = vld [vmem:[#allocation2 + $0x18] sm:$0xff]
        %v599 = vpack.c.bf16 %v596, %v596
        %601 = vrot.lane.b32.xlu0 %v599, 64
        %v602 = vpop.permute.xlu0 %601
        %v604 = vsel %vm357, %v602, 0
        %606 = vmatprep.subr.bf16.mxu0 %v177
        %607 = vmatpush1.bf16.msra.mxu0 %v176
        %608 = vmatprep.subr.bf16.mxu0 %v179
        %609 = vmatpush1.bf16.msra.mxu0 %v178
        %610 = vmatprep.subr.bf16.mxu0 %v181
        %611 = vmatpush1.bf16.msra.mxu0 %v180
        %612 = vmatprep.subr.bf16.mxu0 %v183
        %613 = vmatpush1.bf16.msra.mxu0 %v182
        %614 = vmatprep.subr.bf16.mxu0 0
        %615 = vmatpush1.bf16.msra.mxu0 0
        %616 = vmatprep.subr.bf16.mxu0 0
        %617 = vmatpush1.bf16.msra.mxu0 0
        %618 = vmatprep.subr.bf16.mxu0 0
        %619 = vmatpush1.bf16.msra.mxu0 0
        %620 = vmatprep.subr.bf16.mxu0 0
        %621 = vmatpush1.bf16.msra.mxu0 0
        %622 = vmatprep.subr.bf16.mxu0 0
        %623 = vmatpush1.bf16.msra.mxu0 0
        %624 = vmatprep.subr.bf16.mxu0 0
        %625 = vmatpush1.bf16.msra.mxu0 0
        %626 = vmatprep.subr.bf16.mxu0 0
        %627 = vmatpush1.bf16.msra.mxu0 0
        %628 = vmatprep.subr.bf16.mxu0 0
        %629 = vmatpush1.bf16.msra.mxu0 0
        %630 = vmatprep.subr.bf16.mxu0 0
        %631 = vmatpush1.bf16.msra.mxu0 0
        %632 = vmatprep.subr.bf16.mxu0 0
        %633 = vmatpush1.bf16.msra.mxu0 0
        %634 = vmatprep.subr.bf16.mxu0 0
        %635 = vmatpush1.bf16.msra.mxu0 0
        %636 = vmatprep.subr.bf16.mxu0 0
        %637 = vmatpush1.bf16.msra.mxu0 0
        %638 = vmatprep.mubr.bf16.mxu0 0
        %639 = vmatmul.mubr.bf16.gmra.mrb[0].mxu0 %v604
        %v640 = vpop.f32.mrb[0].mxu0
        %v641 = vadd.f32 0.0, %v640
        %v642 = vpop.f32.mrb[0].mxu0
        %v643 = vadd.f32 0.0, %v642
        %v644 = vpop.f32.mrb[0].mxu0
        %v645 = vpop.f32.mrb[0].mxu0
        %646 = vdwg.mxu0
        %v647 = vadd.f32 %v597, %v641
        %v648 = vadd.f32 %v598, %v643
        %v649 = vxor.u32 %v647, 2147483648
        %v650 = vxor.u32 %v648, 2147483648
        %v651 = vmul.f32 %v649, 1.442695
        %v652 = vpow.pop %v651
        %v653 = vmul.f32 %v650, 1.442695
        %v654 = vpow.pop %v653
        %v655 = vadd.f32 %v652, 1.0
        %v656 = vadd.f32 %v654, 1.0
        %v657 = vrcp.pop %v655
        %v658 = vmul.f32 1.0, %v657
        %v659 = vrcp.pop %v656
        %v660 = vmul.f32 1.0, %v659
        %v661 = vmul.f32 %v658, 2.0
        %v662 = vmul.f32 %v660, 2.0
        %v663 = vsub.f32 %v661, 1.0
        %v664 = vsub.f32 %v662, 1.0
        %v665 = vsel %vm566, %v663, %v658
        %v666 = vsel %vm567, %v664, %v660
        %v667 = vmul.f32 %v665, %v594
        %v668 = vmul.f32 %v665, %v666
        %670 = vrot.lane.b32.xlu0 %v668, 64
        %v671 = vpop.permute.xlu0 %670
        %v673 = vadd.f32 %v667, %v671
        %v674 = vtanh.pop %v673
        %v675 = vmul.f32 %v666, %v674
        %v676 = vld [vmem:[#allocation2 + $0x20] sm:$0xff]
        %v677 = vld [vmem:[#allocation2 + $0x28] sm:$0xff]
        %v678 = vpack.c.bf16 %v675, %v675
        %680 = vrot.lane.b32.xlu0 %v678, 64
        %v681 = vpop.permute.xlu0 %680
        %v683 = vsel %vm357, %v681, 0
        %685 = vmatprep.subr.bf16.mxu0 %v177
        %686 = vmatpush1.bf16.msra.mxu0 %v176
        %687 = vmatprep.subr.bf16.mxu0 %v179
        %688 = vmatpush1.bf16.msra.mxu0 %v178
        %689 = vmatprep.subr.bf16.mxu0 %v181
        %690 = vmatpush1.bf16.msra.mxu0 %v180
        %691 = vmatprep.subr.bf16.mxu0 %v183
        %692 = vmatpush1.bf16.msra.mxu0 %v182
        %693 = vmatprep.subr.bf16.mxu0 0
        %694 = vmatpush1.bf16.msra.mxu0 0
        %695 = vmatprep.subr.bf16.mxu0 0
        %696 = vmatpush1.bf16.msra.mxu0 0
        %697 = vmatprep.subr.bf16.mxu0 0
        %698 = vmatpush1.bf16.msra.mxu0 0
        %699 = vmatprep.subr.bf16.mxu0 0
        %700 = vmatpush1.bf16.msra.mxu0 0
        %701 = vmatprep.subr.bf16.mxu0 0
        %702 = vmatpush1.bf16.msra.mxu0 0
        %703 = vmatprep.subr.bf16.mxu0 0
        %704 = vmatpush1.bf16.msra.mxu0 0
        %705 = vmatprep.subr.bf16.mxu0 0
        %706 = vmatpush1.bf16.msra.mxu0 0
        %707 = vmatprep.subr.bf16.mxu0 0
        %708 = vmatpush1.bf16.msra.mxu0 0
        %709 = vmatprep.subr.bf16.mxu0 0
        %710 = vmatpush1.bf16.msra.mxu0 0
        %711 = vmatprep.subr.bf16.mxu0 0
        %712 = vmatpush1.bf16.msra.mxu0 0
        %713 = vmatprep.subr.bf16.mxu0 0
        %714 = vmatpush1.bf16.msra.mxu0 0
        %715 = vmatprep.subr.bf16.mxu0 0
        %716 = vmatpush1.bf16.msra.mxu0 0
        %717 = vmatprep.mubr.bf16.mxu0 0
        %718 = vmatmul.mubr.bf16.gmra.mrb[0].mxu0 %v683
        %v719 = vpop.f32.mrb[0].mxu0
        %v720 = vadd.f32 0.0, %v719
        %v721 = vpop.f32.mrb[0].mxu0
        %v722 = vadd.f32 0.0, %v721
        %v723 = vpop.f32.mrb[0].mxu0
        %v724 = vpop.f32.mrb[0].mxu0
        %725 = vdwg.mxu0
        %v726 = vadd.f32 %v676, %v720
        %v727 = vadd.f32 %v677, %v722
        %v728 = vxor.u32 %v726, 2147483648
        %v729 = vxor.u32 %v727, 2147483648
        %v730 = vmul.f32 %v728, 1.442695
        %v731 = vpow.pop %v730
        %v732 = vmul.f32 %v729, 1.442695
        %v733 = vpow.pop %v732
        %v734 = vadd.f32 %v731, 1.0
        %v735 = vadd.f32 %v733, 1.0
        %v736 = vrcp.pop %v734
        %v737 = vmul.f32 1.0, %v736
        %v738 = vrcp.pop %v735
        %v739 = vmul.f32 1.0, %v738
        %v740 = vmul.f32 %v737, 2.0
        %v741 = vmul.f32 %v739, 2.0
        %v742 = vsub.f32 %v740, 1.0
        %v743 = vsub.f32 %v741, 1.0
        %v744 = vsel %vm566, %v742, %v737
        %v745 = vsel %vm567, %v743, %v739
        %v746 = vmul.f32 %v744, %v673
        %v747 = vmul.f32 %v744, %v745
        %749 = vrot.lane.b32.xlu0 %v747, 64
        %v750 = vpop.permute.xlu0 %749
        %v752 = vadd.f32 %v746, %v750
        %v753 = vtanh.pop %v752
        %v754 = vmul.f32 %v745, %v753
        %v755 = vld [vmem:[#allocation2 + $0x30] sm:$0xff]
        %v756 = vld [vmem:[#allocation2 + $0x38] sm:$0xff]
        %v757 = vpack.c.bf16 %v754, %v754
        %759 = vrot.lane.b32.xlu0 %v757, 64
        %v760 = vpop.permute.xlu0 %759
        %v762 = vsel %vm357, %v760, 0
        %764 = vmatprep.subr.bf16.mxu0 %v177
        %765 = vmatpush1.bf16.msra.mxu0 %v176
        %766 = vmatprep.subr.bf16.mxu0 %v179
        %767 = vmatpush1.bf16.msra.mxu0 %v178
        %768 = vmatprep.subr.bf16.mxu0 %v181
        %769 = vmatpush1.bf16.msra.mxu0 %v180
        %770 = vmatprep.subr.bf16.mxu0 %v183
        %771 = vmatpush1.bf16.msra.mxu0 %v182
        %772 = vmatprep.subr.bf16.mxu0 0
        %773 = vmatpush1.bf16.msra.mxu0 0
        %774 = vmatprep.subr.bf16.mxu0 0
        %775 = vmatpush1.bf16.msra.mxu0 0
        %776 = vmatprep.subr.bf16.mxu0 0
        %777 = vmatpush1.bf16.msra.mxu0 0
        %778 = vmatprep.subr.bf16.mxu0 0
        %779 = vmatpush1.bf16.msra.mxu0 0
        %780 = vmatprep.subr.bf16.mxu0 0
        %781 = vmatpush1.bf16.msra.mxu0 0
        %782 = vmatprep.subr.bf16.mxu0 0
        %783 = vmatpush1.bf16.msra.mxu0 0
        %784 = vmatprep.subr.bf16.mxu0 0
        %785 = vmatpush1.bf16.msra.mxu0 0
        %786 = vmatprep.subr.bf16.mxu0 0
        %787 = vmatpush1.bf16.msra.mxu0 0
        %788 = vmatprep.subr.bf16.mxu0 0
        %789 = vmatpush1.bf16.msra.mxu0 0
        %790 = vmatprep.subr.bf16.mxu0 0
        %791 = vmatpush1.bf16.msra.mxu0 0
        %792 = vmatprep.subr.bf16.mxu0 0
        %793 = vmatpush1.bf16.msra.mxu0 0
        %794 = vmatprep.subr.bf16.mxu0 0
        %795 = vmatpush1.bf16.msra.mxu0 0
        %796 = vmatprep.mubr.bf16.mxu0 0
        %797 = vmatmul.mubr.bf16.gmra.mrb[0].mxu0 %v762
        %v798 = vpop.f32.mrb[0].mxu0
        %v799 = vadd.f32 0.0, %v798
        %v800 = vpop.f32.mrb[0].mxu0
        %v801 = vadd.f32 0.0, %v800
        %v802 = vpop.f32.mrb[0].mxu0
        %v803 = vpop.f32.mrb[0].mxu0
        %804 = vdwg.mxu0
        %v805 = vadd.f32 %v755, %v799
        %v806 = vadd.f32 %v756, %v801
        %v807 = vxor.u32 %v805, 2147483648
        %v808 = vxor.u32 %v806, 2147483648
        %v809 = vmul.f32 %v807, 1.442695
        %v810 = vpow.pop %v809
        %v811 = vmul.f32 %v808, 1.442695
        %v812 = vpow.pop %v811
        %v813 = vadd.f32 %v810, 1.0
        %v814 = vadd.f32 %v812, 1.0
        %v815 = vrcp.pop %v813
        %v816 = vmul.f32 1.0, %v815
        %v817 = vrcp.pop %v814
        %v818 = vmul.f32 1.0, %v817
        %v819 = vmul.f32 %v816, 2.0
        %v820 = vmul.f32 %v818, 2.0
        %v821 = vsub.f32 %v819, 1.0
        %v822 = vsub.f32 %v820, 1.0
        %v823 = vsel %vm566, %v821, %v816
        %v824 = vsel %vm567, %v822, %v818
        %v825 = vmul.f32 %v823, %v752
        %v826 = vmul.f32 %v823, %v824
        %828 = vrot.lane.b32.xlu0 %v826, 64
        %v829 = vpop.permute.xlu0 %828
        %v831 = vadd.f32 %v825, %v829
        %v832 = vtanh.pop %v831
        %v833 = vmul.f32 %v824, %v832
        %v834 = vld [vmem:[#allocation2 + $0x40] sm:$0xff]
        %v835 = vld [vmem:[#allocation2 + $0x48] sm:$0xff]
        %v836 = vpack.c.bf16 %v833, %v833
        %838 = vrot.lane.b32.xlu0 %v836, 64
        %v839 = vpop.permute.xlu0 %838
        %v841 = vsel %vm357, %v839, 0
        %843 = vmatprep.subr.bf16.mxu0 %v177
        %844 = vmatpush1.bf16.msra.mxu0 %v176
        %845 = vmatprep.subr.bf16.mxu0 %v179
        %846 = vmatpush1.bf16.msra.mxu0 %v178
        %847 = vmatprep.subr.bf16.mxu0 %v181
        %848 = vmatpush1.bf16.msra.mxu0 %v180
        %849 = vmatprep.subr.bf16.mxu0 %v183
        %850 = vmatpush1.bf16.msra.mxu0 %v182
        %851 = vmatprep.subr.bf16.mxu0 0
        %852 = vmatpush1.bf16.msra.mxu0 0
        %853 = vmatprep.subr.bf16.mxu0 0
        %854 = vmatpush1.bf16.msra.mxu0 0
        %855 = vmatprep.subr.bf16.mxu0 0
        %856 = vmatpush1.bf16.msra.mxu0 0
        %857 = vmatprep.subr.bf16.mxu0 0
        %858 = vmatpush1.bf16.msra.mxu0 0
        %859 = vmatprep.subr.bf16.mxu0 0
        %860 = vmatpush1.bf16.msra.mxu0 0
        %861 = vmatprep.subr.bf16.mxu0 0
        %862 = vmatpush1.bf16.msra.mxu0 0
        %863 = vmatprep.subr.bf16.mxu0 0
        %864 = vmatpush1.bf16.msra.mxu0 0
        %865 = vmatprep.subr.bf16.mxu0 0
        %866 = vmatpush1.bf16.msra.mxu0 0
        %867 = vmatprep.subr.bf16.mxu0 0
        %868 = vmatpush1.bf16.msra.mxu0 0
        %869 = vmatprep.subr.bf16.mxu0 0
        %870 = vmatpush1.bf16.msra.mxu0 0
        %871 = vmatprep.subr.bf16.mxu0 0
        %872 = vmatpush1.bf16.msra.mxu0 0
        %873 = vmatprep.subr.bf16.mxu0 0
        %874 = vmatpush1.bf16.msra.mxu0 0
        %875 = vmatprep.mubr.bf16.mxu0 0
        %876 = vmatmul.mubr.bf16.gmra.mrb[0].mxu0 %v841
        %v877 = vpop.f32.mrb[0].mxu0
        %v878 = vadd.f32 0.0, %v877
        %v879 = vpop.f32.mrb[0].mxu0
        %v880 = vadd.f32 0.0, %v879
        %v881 = vpop.f32.mrb[0].mxu0
        %v882 = vpop.f32.mrb[0].mxu0
        %883 = vdwg.mxu0
        %v884 = vadd.f32 %v834, %v878
        %v885 = vadd.f32 %v835, %v880
        %v886 = vxor.u32 %v884, 2147483648
        %v887 = vxor.u32 %v885, 2147483648
        %v888 = vmul.f32 %v886, 1.442695
        %v889 = vpow.pop %v888
        %v890 = vmul.f32 %v887, 1.442695
        %v891 = vpow.pop %v890
        %v892 = vadd.f32 %v889, 1.0
        %v893 = vadd.f32 %v891, 1.0
        %v894 = vrcp.pop %v892
        %v895 = vmul.f32 1.0, %v894
        %v896 = vrcp.pop %v893
        %v897 = vmul.f32 1.0, %v896
        %v898 = vmul.f32 %v895, 2.0
        %v899 = vmul.f32 %v897, 2.0
        %v900 = vsub.f32 %v898, 1.0
        %v901 = vsub.f32 %v899, 1.0
        %v902 = vsel %vm566, %v900, %v895
        %v903 = vsel %vm567, %v901, %v897
        %v904 = vmul.f32 %v902, %v831
        %v905 = vmul.f32 %v902, %v903
        %907 = vrot.lane.b32.xlu0 %v905, 64
        %v908 = vpop.permute.xlu0 %907
        %v910 = vadd.f32 %v904, %v908
        %v911 = vtanh.pop %v910
        %v912 = vmul.f32 %v903, %v911
        %v913 = vld [vmem:[#allocation2 + $0x50] sm:$0xff]
        %v914 = vld [vmem:[#allocation2 + $0x58] sm:$0xff]
        %v915 = vpack.c.bf16 %v912, %v912
        %917 = vrot.lane.b32.xlu0 %v915, 64
        %v918 = vpop.permute.xlu0 %917
        %v920 = vsel %vm357, %v918, 0
        %922 = vmatprep.subr.bf16.mxu0 %v177
        %923 = vmatpush1.bf16.msra.mxu0 %v176
        %924 = vmatprep.subr.bf16.mxu0 %v179
        %925 = vmatpush1.bf16.msra.mxu0 %v178
        %926 = vmatprep.subr.bf16.mxu0 %v181
        %927 = vmatpush1.bf16.msra.mxu0 %v180
        %928 = vmatprep.subr.bf16.mxu0 %v183
        %929 = vmatpush1.bf16.msra.mxu0 %v182
        %930 = vmatprep.subr.bf16.mxu0 0
        %931 = vmatpush1.bf16.msra.mxu0 0
        %932 = vmatprep.subr.bf16.mxu0 0
        %933 = vmatpush1.bf16.msra.mxu0 0
        %934 = vmatprep.subr.bf16.mxu0 0
        %935 = vmatpush1.bf16.msra.mxu0 0
        %936 = vmatprep.subr.bf16.mxu0 0
        %937 = vmatpush1.bf16.msra.mxu0 0
        %938 = vmatprep.subr.bf16.mxu0 0
        %939 = vmatpush1.bf16.msra.mxu0 0
        %940 = vmatprep.subr.bf16.mxu0 0
        %941 = vmatpush1.bf16.msra.mxu0 0
        %942 = vmatprep.subr.bf16.mxu0 0
        %943 = vmatpush1.bf16.msra.mxu0 0
        %944 = vmatprep.subr.bf16.mxu0 0
        %945 = vmatpush1.bf16.msra.mxu0 0
        %946 = vmatprep.subr.bf16.mxu0 0
        %947 = vmatpush1.bf16.msra.mxu0 0
        %948 = vmatprep.subr.bf16.mxu0 0
        %949 = vmatpush1.bf16.msra.mxu0 0
        %950 = vmatprep.subr.bf16.mxu0 0
        %951 = vmatpush1.bf16.msra.mxu0 0
        %952 = vmatprep.subr.bf16.mxu0 0
        %953 = vmatpush1.bf16.msra.mxu0 0
        %954 = vmatprep.mubr.bf16.mxu0 0
        %955 = vmatmul.mubr.bf16.gmra.mrb[0].mxu0 %v920
        %v956 = vpop.f32.mrb[0].mxu0
        %v957 = vadd.f32 0.0, %v956
        %v958 = vpop.f32.mrb[0].mxu0
        %v959 = vadd.f32 0.0, %v958
        %v960 = vpop.f32.mrb[0].mxu0
        %v961 = vpop.f32.mrb[0].mxu0
        %962 = vdwg.mxu0
        %v963 = vadd.f32 %v913, %v957
        %v964 = vadd.f32 %v914, %v959
        %v965 = vxor.u32 %v963, 2147483648
        %v966 = vxor.u32 %v964, 2147483648
        %v967 = vmul.f32 %v965, 1.442695
        %v968 = vpow.pop %v967
        %v969 = vmul.f32 %v966, 1.442695
        %v970 = vpow.pop %v969
        %v971 = vadd.f32 %v968, 1.0
        %v972 = vadd.f32 %v970, 1.0
        %v973 = vrcp.pop %v971
        %v974 = vmul.f32 1.0, %v973
        %v975 = vrcp.pop %v972
        %v976 = vmul.f32 1.0, %v975
        %v977 = vmul.f32 %v974, 2.0
        %v978 = vmul.f32 %v976, 2.0
        %v979 = vsub.f32 %v977, 1.0
        %v980 = vsub.f32 %v978, 1.0
        %v981 = vsel %vm566, %v979, %v974
        %v982 = vsel %vm567, %v980, %v976
        %v983 = vmul.f32 %v981, %v910
        %v984 = vmul.f32 %v981, %v982
        %986 = vrot.lane.b32.xlu0 %v984, 64
        %v987 = vpop.permute.xlu0 %986
        %v989 = vadd.f32 %v983, %v987
        %v990 = vtanh.pop %v989
        %v991 = vmul.f32 %v982, %v990
        %v992 = vld [vmem:[#allocation2 + $0x60] sm:$0xff]
        %v993 = vld [vmem:[#allocation2 + $0x68] sm:$0xff]
        %v994 = vpack.c.bf16 %v991, %v991
        %996 = vrot.lane.b32.xlu0 %v994, 64
        %v997 = vpop.permute.xlu0 %996
        %v999 = vsel %vm357, %v997, 0
        %1001 = vmatprep.subr.bf16.mxu0 %v177
        %1002 = vmatpush1.bf16.msra.mxu0 %v176
        %1003 = vmatprep.subr.bf16.mxu0 %v179
        %1004 = vmatpush1.bf16.msra.mxu0 %v178
        %1005 = vmatprep.subr.bf16.mxu0 %v181
        %1006 = vmatpush1.bf16.msra.mxu0 %v180
        %1007 = vmatprep.subr.bf16.mxu0 %v183
        %1008 = vmatpush1.bf16.msra.mxu0 %v182
        %1009 = vmatprep.subr.bf16.mxu0 0
        %1010 = vmatpush1.bf16.msra.mxu0 0
        %1011 = vmatprep.subr.bf16.mxu0 0
        %1012 = vmatpush1.bf16.msra.mxu0 0
        %1013 = vmatprep.subr.bf16.mxu0 0
        %1014 = vmatpush1.bf16.msra.mxu0 0
        %1015 = vmatprep.subr.bf16.mxu0 0
        %1016 = vmatpush1.bf16.msra.mxu0 0
        %1017 = vmatprep.subr.bf16.mxu0 0
        %1018 = vmatpush1.bf16.msra.mxu0 0
        %1019 = vmatprep.subr.bf16.mxu0 0
        %1020 = vmatpush1.bf16.msra.mxu0 0
        %1021 = vmatprep.subr.bf16.mxu0 0
        %1022 = vmatpush1.bf16.msra.mxu0 0
        %1023 = vmatprep.subr.bf16.mxu0 0
        %1024 = vmatpush1.bf16.msra.mxu0 0
        %1025 = vmatprep.subr.bf16.mxu0 0
        %1026 = vmatpush1.bf16.msra.mxu0 0
        %1027 = vmatprep.subr.bf16.mxu0 0
        %1028 = vmatpush1.bf16.msra.mxu0 0
        %1029 = vmatprep.subr.bf16.mxu0 0
        %1030 = vmatpush1.bf16.msra.mxu0 0
        %1031 = vmatprep.subr.bf16.mxu0 0
        %1032 = vmatpush1.bf16.msra.mxu0 0
        %1033 = vmatprep.mubr.bf16.mxu0 0
        %1034 = vmatmul.mubr.bf16.gmra.mrb[0].mxu0 %v999
        %v1035 = vpop.f32.mrb[0].mxu0
        %v1036 = vadd.f32 0.0, %v1035
        %v1037 = vpop.f32.mrb[0].mxu0
        %v1038 = vadd.f32 0.0, %v1037
        %v1039 = vpop.f32.mrb[0].mxu0
        %v1040 = vpop.f32.mrb[0].mxu0
        %1041 = vdwg.mxu0
        %v1042 = vadd.f32 %v992, %v1036
        %v1043 = vadd.f32 %v993, %v1038
        %v1044 = vxor.u32 %v1042, 2147483648
        %v1045 = vxor.u32 %v1043, 2147483648
        %v1046 = vmul.f32 %v1044, 1.442695
        %v1047 = vpow.pop %v1046
        %v1048 = vmul.f32 %v1045, 1.442695
        %v1049 = vpow.pop %v1048
        %v1050 = vadd.f32 %v1047, 1.0
        %v1051 = vadd.f32 %v1049, 1.0
        %v1052 = vrcp.pop %v1050
        %v1053 = vmul.f32 1.0, %v1052
        %v1054 = vrcp.pop %v1051
        %v1055 = vmul.f32 1.0, %v1054
        %v1056 = vmul.f32 %v1053, 2.0
        %v1057 = vmul.f32 %v1055, 2.0
        %v1058 = vsub.f32 %v1056, 1.0
        %v1059 = vsub.f32 %v1057, 1.0
        %v1060 = vsel %vm566, %v1058, %v1053
        %v1061 = vsel %vm567, %v1059, %v1055
        %v1062 = vmul.f32 %v1060, %v989
        %v1063 = vmul.f32 %v1060, %v1061
        %1065 = vrot.lane.b32.xlu0 %v1063, 64
        %v1066 = vpop.permute.xlu0 %1065
        %v1068 = vadd.f32 %v1062, %v1066
        %v1069 = vtanh.pop %v1068
        %v1070 = vmul.f32 %v1061, %v1069
        %v1071 = vld [vmem:[#allocation2 + $0x70] sm:$0xff]
        %v1072 = vld [vmem:[#allocation2 + $0x78] sm:$0xff]
        %v1073 = vpack.c.bf16 %v1070, %v1070
        %1075 = vrot.lane.b32.xlu0 %v1073, 64
        %v1076 = vpop.permute.xlu0 %1075
        %v1078 = vsel %vm357, %v1076, 0
        %1080 = vmatprep.subr.bf16.mxu0 %v177
        %1081 = vmatpush1.bf16.msra.mxu0 %v176
        %1082 = vmatprep.subr.bf16.mxu0 %v179
        %1083 = vmatpush1.bf16.msra.mxu0 %v178
        %1084 = vmatprep.subr.bf16.mxu0 %v181
        %1085 = vmatpush1.bf16.msra.mxu0 %v180
        %1086 = vmatprep.subr.bf16.mxu0 %v183
        %1087 = vmatpush1.bf16.msra.mxu0 %v182
        %1088 = vmatprep.subr.bf16.mxu0 0
        %1089 = vmatpush1.bf16.msra.mxu0 0
        %1090 = vmatprep.subr.bf16.mxu0 0
        %1091 = vmatpush1.bf16.msra.mxu0 0
        %1092 = vmatprep.subr.bf16.mxu0 0
        %1093 = vmatpush1.bf16.msra.mxu0 0
        %1094 = vmatprep.subr.bf16.mxu0 0
        %1095 = vmatpush1.bf16.msra.mxu0 0
        %1096 = vmatprep.subr.bf16.mxu0 0
        %1097 = vmatpush1.bf16.msra.mxu0 0
        %1098 = vmatprep.subr.bf16.mxu0 0
        %1099 = vmatpush1.bf16.msra.mxu0 0
        %1100 = vmatprep.subr.bf16.mxu0 0
        %1101 = vmatpush1.bf16.msra.mxu0 0
        %1102 = vmatprep.subr.bf16.mxu0 0
        %1103 = vmatpush1.bf16.msra.mxu0 0
        %1104 = vmatprep.subr.bf16.mxu0 0
        %1105 = vmatpush1.bf16.msra.mxu0 0
        %1106 = vmatprep.subr.bf16.mxu0 0
        %1107 = vmatpush1.bf16.msra.mxu0 0
        %1108 = vmatprep.subr.bf16.mxu0 0
        %1109 = vmatpush1.bf16.msra.mxu0 0
        %1110 = vmatprep.subr.bf16.mxu0 0
        %1111 = vmatpush1.bf16.msra.mxu0 0
        %1112 = vmatprep.mubr.bf16.mxu0 0
        %1113 = vmatmul.mubr.bf16.gmra.mrb[0].mxu0 %v1078
        %v1114 = vpop.f32.mrb[0].mxu0
        %v1115 = vadd.f32 0.0, %v1114
        %v1116 = vpop.f32.mrb[0].mxu0
        %v1117 = vadd.f32 0.0, %v1116
        %v1118 = vpop.f32.mrb[0].mxu0
        %v1119 = vpop.f32.mrb[0].mxu0
        %1120 = vdwg.mxu0
        %v1121 = vadd.f32 %v1071, %v1115
        %v1122 = vadd.f32 %v1072, %v1117
        %v1123 = vxor.u32 %v1121, 2147483648
        %v1124 = vxor.u32 %v1122, 2147483648
        %v1125 = vmul.f32 %v1123, 1.442695
        %v1126 = vpow.pop %v1125
        %v1127 = vmul.f32 %v1124, 1.442695
        %v1128 = vpow.pop %v1127
        %v1129 = vadd.f32 %v1126, 1.0
        %v1130 = vadd.f32 %v1128, 1.0
        %v1131 = vrcp.pop %v1129
        %v1132 = vmul.f32 1.0, %v1131
        %v1133 = vrcp.pop %v1130
        %v1134 = vmul.f32 1.0, %v1133
        %v1135 = vmul.f32 %v1132, 2.0
        %v1136 = vmul.f32 %v1134, 2.0
        %v1137 = vsub.f32 %v1135, 1.0
        %v1138 = vsub.f32 %v1136, 1.0
        %v1139 = vsel %vm566, %v1137, %v1132
        %v1140 = vsel %vm567, %v1138, %v1134
        %v1141 = vmul.f32 %v1139, %v1068
        %v1142 = vmul.f32 %v1139, %v1140
        %1144 = vrot.lane.b32.xlu0 %v1142, 64
        %v1145 = vpop.permute.xlu0 %1144
        %v1147 = vadd.f32 %v1141, %v1145
        %v1148 = vtanh.pop %v1147
        %v1149 = vmul.f32 %v1140, %v1148
        %v1150 = vpack.c.bf16 %v1149, %v1149
        %v1152 = vlaneseq
        %v1153 = vshrl.u32 %v1152, 7
        %v1154 = vsub.s32 0, %v1153
        %v1155 = vrot.slane %v242, %v1154
        %1158 = vrot.lane.b32.xlu0 %v1150, 64
        %v1159 = vpop.permute.xlu0 %1158
        %v1161 = vsel %vm357, %v1159, 0
        %1163 = vmatprep.subr.bf16.mxu0 0
        %1164 = vmatpush1.bf16.msra.mxu0 %v237
        %1165 = vmatprep.subr.bf16.mxu0 0
        %1166 = vmatpush1.bf16.msra.mxu0 %v238
        %1167 = vmatprep.subr.bf16.mxu0 0
        %1168 = vmatpush1.bf16.msra.mxu0 %v239
        %1169 = vmatprep.subr.bf16.mxu0 0
        %1170 = vmatpush1.bf16.msra.mxu0 %v240
        %1171 = vmatprep.subr.bf16.mxu0 0
        %1172 = vmatpush1.bf16.msra.mxu0 0
        %1173 = vmatprep.subr.bf16.mxu0 0
        %1174 = vmatpush1.bf16.msra.mxu0 0
        %1175 = vmatprep.subr.bf16.mxu0 0
        %1176 = vmatpush1.bf16.msra.mxu0 0
        %1177 = vmatprep.subr.bf16.mxu0 0
        %1178 = vmatpush1.bf16.msra.mxu0 0
        %1179 = vmatprep.subr.bf16.mxu0 0
        %1180 = vmatpush1.bf16.msra.mxu0 0
        %1181 = vmatprep.subr.bf16.mxu0 0
        %1182 = vmatpush1.bf16.msra.mxu0 0
        %1183 = vmatprep.subr.bf16.mxu0 0
        %1184 = vmatpush1.bf16.msra.mxu0 0
        %1185 = vmatprep.subr.bf16.mxu0 0
        %1186 = vmatpush1.bf16.msra.mxu0 0
        %1187 = vmatprep.subr.bf16.mxu0 0
        %1188 = vmatpush1.bf16.msra.mxu0 0
        %1189 = vmatprep.subr.bf16.mxu0 0
        %1190 = vmatpush1.bf16.msra.mxu0 0
        %1191 = vmatprep.subr.bf16.mxu0 0
        %1192 = vmatpush1.bf16.msra.mxu0 0
        %1193 = vmatprep.subr.bf16.mxu0 0
        %1194 = vmatpush1.bf16.msra.mxu0 0
        %1195 = vmatprep.mubr.bf16.mxu0 0
        %1196 = vmatmul.mubr.bf16.gmra.mrb[0].mxu0 %v1161
        %v1197 = vpop.f32.mrb[0].mxu0
        %v1198 = vadd.f32 %v1155, %v1197
        %v1199 = vpop.f32.mrb[0].mxu0
        %v1200 = vpop.f32.mrb[0].mxu0
        %v1201 = vpop.f32.mrb[0].mxu0
        %1202 = vdwg.mxu0
        %1203 = vst [vmem:[%s152] sm:$0xff] %v1198
        %s1204 = sand.u32 %s72, 1
        %s1205 = scalar_lea.sflag [#allocation5], %s1204
        %s1206 = sand.u32 %s72, 1
        %s1207 = smul.addr %s1206, 8
        %s1208 = scalar_lea.vmem [#allocation6], %s1207
        // Predicated region
        $region33: #{tpu_custom_call.1} parent=27 // pred_check
          %p1209 = pneg %p82
        $region34: #{tpu_custom_call.1} parent=27 // pred_check_branch
          %1211 = sbr.rel (%p1209) target = $region36
        $region35: #{tpu_custom_call.1} parent=27 // pred_region
          %s1213 = ssub.s32 128, 128
          %1214 = vsyncadd %s1205, %s1213
          %s1215 = smul.addr %s17, 128
          %s1216 = scalar_lea.hbm %s2, %s1215
          %s1218 = sshll.u32 %s1208, 4
          %s1219 = int_to_ptr.vmem [resolvable:$true] %s1218
          %1221 = dma.vmem_to_hbm [thread:$0]  %s1219, 128, %s1216, %s1205
        $region36: #{tpu_custom_call.1} parent=27 // pred_fallthru
          _
      $region28: #{tpu_custom_call.1} parent=5 // pred_fallthru
        _
      %p1222 = scmp.le.s32.totalorder 2, %s12
      // Predicated region
      $region37: #{tpu_custom_call.1} parent=5 // pred_check
        %p1223 = pneg %p1222
      $region38: #{tpu_custom_call.1} parent=5 // pred_check_branch
        %1225 = sbr.rel (%p1223) target = $region40
      $region39: #{tpu_custom_call.1} parent=5 // pred_region
        %s1226 = ssub.s32 %s12, 2
        // Predicated region
        $region41: #{tpu_custom_call.1} parent=39 // pred_check
          %p1227 = pneg %p88
        $region42: #{tpu_custom_call.1} parent=39 // pred_check_branch
          %1229 = sbr.rel (%p1227) target = $region44
        $region43: #{tpu_custom_call.1} parent=39 // pred_region
          %s1230 = sand.u32 %s73, 1
          %s1231 = scalar_lea.sflag [#allocation5], %s1230
          %s1232 = sand.u32 %s73, 1
          %s1233 = smul.addr %s1232, 8
          %s1234 = scalar_lea.vmem [#allocation6], %s1233
          %1235 = dma.done %s1231, 128
        $region44: #{tpu_custom_call.1} parent=39 // pred_fallthru
          _
      $region40: #{tpu_custom_call.1} parent=5 // pred_fallthru
        _
    $region6: #{tpu_custom_call.1} parent=1 // loop_footer
      %s16 = sadd.s32 1, %s12
    $region7: #{tpu_custom_call.1} parent=1 // loop_footer_branch
      %11 = sbr.rel target = $region3
    $region8: #{tpu_custom_call.1} parent=1 // loop_exit
      _
    %1236 = vsyncpa [#allocation4], 1
    %s1237 = scalar_lea.sflag [#allocation4], 1
    %1238 = vsyncpa %s1237, 1
    %1239 = vsyncpa [#allocation5], 1
    %s1240 = scalar_lea.sflag [#allocation5], 1
    %1241 = vsyncpa %s1240, 1

</llo_original>
